<compile_context>
chip_gen: v7x
topology: tpu7x:2x2x1
jax: 0.10.0
libtpu: 0.0.40
codegen_flags: <defaults>
</compile_context>

<pallas_src>
import functools

import numpy as np
import jax
import jax.numpy as jnp
from jax.experimental import pallas as pl
from jax.experimental.pallas import tpu as pltpu


# ----------------------------- Pallas kernel --------------------------------

def _disc_block_kernel(x_ref, t1_ref, b1_ref, t2_ref, t0_ref, bsum_ref,
                       out_ref, pad1_ref, pad2_ref, *,
                       NB, H, W, Cin, Cout, WO, downsample, use_sc_conv):
    WCin = W * Cin
    WCout = W * Cout
    WOC = WO * Cout
    HO = H // 2 if downsample else H

    x = x_ref[...]                                     # (NB, H, W*Cin)  f32

    def banded_conv(pad_ref, t_ref, k_in):
        # 3 kernel rows -> 3 MXU dots; bf16 operands, f32 accumulation.
        acc = None
        for dh in range(3):
            slab = pad_ref[:, dh:dh + H, :].reshape(NB * H, k_in)
            part = jnp.dot(slab.astype(jnp.bfloat16), t_ref[dh],
                           preferred_element_type=jnp.float32)
            acc = part if acc is None else acc + part
        return acc

    # ---- main branch: relu(x), zero-pad one row top/bottom along H only ----
    # (unconditional on purpose: see megacore note in the header comment)
    pad1_ref[:, 0:1, :] = jnp.zeros((NB, 1, WCin), jnp.float32)
    pad1_ref[:, H + 1:H + 2, :] = jnp.zeros((NB, 1, WCin), jnp.float32)
    pad1_ref[:, 1:H + 1, :] = jnp.maximum(x, 0.0)

    # conv3x3 #1 (W-shift + channel contraction folded into t1)
    y1 = banded_conv(pad1_ref, t1_ref, WCin) + b1_ref[...]      # (NB*H, W*Cout) f32

    # ---- relu(y1), H-padded ----
    pad2_ref[:, 0:1, :] = jnp.zeros((NB, 1, WCout), jnp.float32)
    pad2_ref[:, H + 1:H + 2, :] = jnp.zeros((NB, 1, WCout), jnp.float32)
    pad2_ref[:, 1:H + 1, :] = jnp.maximum(y1, 0.0).reshape(NB, H, WCout)

    # conv3x3 #2 (avgpool-along-W already folded into t2 when downsampling)
    acc = banded_conv(pad2_ref, t2_ref, WCout)                  # (NB*H, WO*Cout) f32

    # ---- shortcut on the *un-activated* input ----
    if use_sc_conv:
        acc = acc + jnp.dot(x.reshape(NB * H, WCin).astype(jnp.bfloat16),
                            t0_ref[...], preferred_element_type=jnp.float32)
    else:
        # identity shortcut: only reachable when Cin == Cout and no downsample
        acc = acc + x.reshape(NB * H, WOC)

    if downsample:
        # avgpool along H: add adjacent row pairs (0.25 factor lives in t2/t0).
        pairs = acc.reshape(NB * HO, 2, WOC)
        out = (pairs[:, 0, :] + pairs[:, 1, :]) + bsum_ref[...]
    else:
        out = acc + bsum_ref[...]

    out_ref[...] = out.reshape(NB, HO, WOC).astype(out_ref.dtype)


# ------------------------- block-size / VMEM planning ------------------------

_VMEM_BUDGET = 24 * 1024 * 1024   # headroom inside the 32 MiB scoped limit (v7x)


def _pick_batch_block(n, h, target_rows=256, min_steps=4):
    """Largest divisor of n s.t. M = NB*H is a few hundred rows AND the grid has
    at least `min_steps` steps (pipelining / v7x dual-TC)."""
    nb = max(1, min(n, target_rows // max(h, 1)))
    nb = min(nb, max(1, n // min_steps))
    while n % nb:
        nb -= 1
    return nb


def _vmem_footprint_bytes(NB, H, W, Cin, Cout, HO, WO):
    """Double-buffered pipeline blocks + persistent scratch, in bytes."""
    f32, bf16, dbl = 4, 2, 2
    b = dbl * NB * H * W * Cin * f32                    # x block
    b += dbl * 3 * (W * Cin) * (W * Cout) * bf16        # t1
    b += dbl * 3 * (W * Cout) * (WO * Cout) * bf16      # t2
    b += dbl * (W * Cin) * (WO * Cout) * bf16           # t0
    b += dbl * 8 * (W * Cout + WO * Cout) * f32         # biases (sublane-padded)
    b += dbl * NB * HO * WO * Cout * f32                # out block
    b += NB * (H + 2) * W * Cin * f32                   # pad1 scratch
    b += NB * (H + 2) * W * Cout * f32                  # pad2 scratch
    return b


# ------------------------------ wrappers (glue) -------------------------------

def disc_block_rows(x_rows, params, in_channels, out_channels,
                    downsample=True, batch_block=None):
    """DiscBlock on lane-dense rows: (N, H, W*Cin) f32 -> (N, HO, WO*Cout) f32."""
    N, H, WC = x_rows.shape
    Cin = in_channels
    assert WC % Cin == 0
    W = WC // Cin
    Cout = out_channels
    assert H % 2 == 0 and W % 2 == 0
    ch_mismatch = (in_channels != out_channels)
    use_sc_conv = bool(downsample or ch_mismatch)

    WO = W // 2 if downsample else W
    HO = H // 2 if downsample else H
    if not use_sc_conv:
        # identity shortcut adds x directly onto the conv2 accumulator
        assert W * Cin == WO * Cout

    x_rows = x_rows.astype(jnp.float32)

    # ---- fold conv taps into banded matmul weights (trace-time setup) ----
    w1, w2, w0 = params["w1"], params["w2"], params["w0"]
    b1, b2, b0 = params["b1"], params["b2"], params["b0"]

    # ind[dw, wi, wo] = 1 iff input column wi feeds output column wo via tap dw.
    ind = np.zeros((3, W, W), np.float32)
    for dw in range(3):
        for wo in range(W):
            wi = wo + dw - 1
            if 0 <= wi < W:
                ind[dw, wi, wo] = 1.0
    ind = jnp.asarray(ind)

    taps1 = jnp.transpose(w1, (2, 3, 1, 0)).astype(jnp.float32)   # (3,3,Cin,Cout)
    taps2 = jnp.transpose(w2, (2, 3, 1, 0)).astype(jnp.float32)   # (3,3,Cout,Cout)
    # T[dh]: (W*Cin_or_Cout, W*Cout) banded matrices, one per kernel row.
    t1 = jnp.einsum('dxw,hdio->hxiwo', ind, taps1).reshape(3, W * Cin, W * Cout)
    t2 = jnp.einsum('dxw,hdio->hxiwo', ind, taps2).reshape(3, W * Cout, W * Cout)
    w0m = jnp.transpose(w0[:, :, 0, 0], (1, 0)).astype(jnp.float32)  # (Cin, Cout)
    t0 = jnp.einsum('xw,io->xiwo', jnp.eye(W, dtype=jnp.float32),
                    w0m).reshape(W * Cin, W * Cout)

    if downsample:
        # Fold the W-half of the 2x2 avgpool (linear) into t2 and t0.
        pw = np.zeros((W, WO), np.float32)
        for w_ in range(W):
            pw[w_, w_ // 2] = 0.25                     # full 2x2 pool factor
        pc = jnp.einsum('wv,cd->wcvd', jnp.asarray(pw),
                        jnp.eye(Cout, dtype=jnp.float32)).reshape(W * Cout, WO * Cout)
        t2 = jnp.einsum('hkm,mn->hkn', t2, pc)         # (3, W*Cout, WO*Cout)
        t0 = t0 @ pc                                   # (W*Cin,  WO*Cout)

    # bf16 weights: native MXU operand dtype on v5e/v6e/v7x, halves weight DMA/VMEM.
    t1 = t1.astype(jnp.bfloat16)
    t2 = t2.astype(jnp.bfloat16)
    t0 = t0.astype(jnp.bfloat16)

    # Lane-tiled biases (kept f32; added after f32-accumulated dots).
    b1_t = jnp.tile(b1.astype(jnp.float32), W).reshape(1, W * Cout)
    bsum = b2.astype(jnp.float32) + (b0.astype(jnp.float32) if use_sc_conv else 0.0)
    bsum_t = jnp.tile(bsum, WO).reshape(1, WO * Cout)

    # ---- block-size selection with explicit VMEM accounting (v7x: 64 MiB/TC) ----
    NB = batch_block if batch_block is not None else _pick_batch_block(N, H)
    while NB > 1 and _vmem_footprint_bytes(NB, H, W, Cin, Cout, HO, WO) > _VMEM_BUDGET:
        NB -= 1
        while N % NB:
            NB -= 1
    assert N % NB == 0
    grid = (N // NB,)

    kernel = functools.partial(
        _disc_block_kernel, NB=NB, H=H, W=W, Cin=Cin, Cout=Cout, WO=WO,
        downsample=bool(downsample), use_sc_conv=use_sc_conv)

    grid_spec = pltpu.PrefetchScalarGridSpec(
        num_scalar_prefetch=0,
        grid=grid,
        in_specs=[
            pl.BlockSpec((NB, H, W * Cin), lambda n: (n, 0, 0)),
            # Weight/bias blocks: constant index_map -> fetched once, resident.
            # TODO(synk): add pipeline_mode=pl.Buffered(1) here once weight VMEM
            #             pressure matters (production channel counts on v7x).
            pl.BlockSpec((3, W * Cin, W * Cout), lambda n: (0, 0, 0)),
            pl.BlockSpec((1, W * Cout), lambda n: (0, 0)),
            pl.BlockSpec((3, W * Cout, WO * Cout), lambda n: (0, 0, 0)),
            pl.BlockSpec((W * Cin, WO * Cout), lambda n: (0, 0)),
            pl.BlockSpec((1, WO * Cout), lambda n: (0, 0)),
        ],
        out_specs=pl.BlockSpec((NB, HO, WO * Cout), lambda n: (n, 0, 0)),
        scratch_shapes=[
            pltpu.VMEM((NB, H + 2, W * Cin), jnp.float32),    # H-padded relu(x)
            pltpu.VMEM((NB, H + 2, W * Cout), jnp.float32),   # H-padded relu(conv1)
        ],
    )

    out_rows = pl.pallas_call(
        kernel,
        out_shape=jax.ShapeDtypeStruct((N, HO, WO * Cout), jnp.float32),
        grid_spec=grid_spec,
        compiler_params=pltpu.CompilerParams(
            dimension_semantics=("parallel",),   # only matters on multi-TC (v7x)
            vmem_limit_bytes=32 * 1024 * 1024,
        ),
    )(x_rows, t1, b1_t, t2, t0, bsum_t)
    return out_rows


def disc_block_forward(x_nchw, params, in_channels, out_channels,
                       downsample=True, batch_block=None):
    """DiscBlock.forward.  x_nchw: (N, Cin, H, W) f32 -> (N, Cout, H', W') f32."""
    N, Cin, H, W = x_nchw.shape
    assert Cin == in_channels
    Cout = out_channels
    HO = H // 2 if downsample else H
    WO = W // 2 if downsample else W

    # NCHW -> lane-dense rows.  When stacking DiscBlocks, stay in the rows layout
    # (call disc_block_rows directly) to avoid these two HBM round-trip transposes.
    x_rows = jnp.transpose(x_nchw, (0, 2, 3, 1)).reshape(N, H, W * Cin)
    out_rows = disc_block_rows(x_rows, params, in_channels, out_channels,
                               downsample=downsample, batch_block=batch_block)
    out_nhwc = out_rows.reshape(N, HO, WO, Cout)
    return jnp.transpose(out_nhwc, (0, 3, 1, 2))


# ----------------------- parameter init (deterministic) ----------------------

def _spectral_normalize(w_oihw, key, n_iter=1, eps=1e-12):
    # Mirrors torch.nn.utils.spectral_norm at forward time: one power iteration
    # on W reshaped to (Cout, -1), then divide the weight by sigma.
    out_c = w_oihw.shape[0]
    w_mat = w_oihw.reshape(out_c, -1)
    u = jax.random.normal(key, (out_c,), jnp.float32)
    u = u / (jnp.linalg.norm(u) + eps)
    v = None
    for _ in range(n_iter):
        v = w_mat.T @ u
        v = v / (jnp.linalg.norm(v) + eps)
        u = w_mat @ v
        u = u / (jnp.linalg.norm(u) + eps)
    sigma = jnp.dot(u, w_mat @ v)
    return w_oihw / sigma


def make_params(key, in_ch, out_ch):
    ks = jax.random.split(key, 9)

    def conv_w(k, o, i, kh, kw):
        bound = 1.0 / ((i * kh * kw) ** 0.5)       # PyTorch Conv2d default init
        return jax.random.uniform(k, (o, i, kh, kw), jnp.float32, -bound, bound)

    def conv_b(k, o, fan_in):
        bound = 1.0 / (fan_in ** 0.5)
        return jax.random.uniform(k, (o,), jnp.float32, -bound, bound)

    w1 = _spectral_normalize(conv_w(ks[0], out_ch, in_ch, 3, 3), ks[6])
    b1 = conv_b(ks[1], out_ch, in_ch * 9)
    w2 = _spectral_normalize(conv_w(ks[2], out_ch, out_ch, 3, 3), ks[7])
    b2 = conv_b(ks[3], out_ch, out_ch * 9)
    w0 = _spectral_normalize(conv_w(ks[4], out_ch, in_ch, 1, 1), ks[8])
    b0 = conv_b(ks[5], out_ch, in_ch)
    return dict(w1=w1, b1=b1, w2=w2, b2=b2, w0=w0, b0=b0)


# --------------------------- pure-JAX reference ------------------------------

def _conv_nchw(x, w, b, pad):
    y = jax.lax.conv_general_dilated(
        x, w, window_strides=(1, 1), padding=[(pad, pad), (pad, pad)],
        dimension_numbers=("NCHW", "OIHW", "NCHW"))
    return y + b[None, :, None, None]


def _avgpool2_nchw(x):
    n, c, h, w = x.shape
    return x.reshape(n, c, h // 2, 2, w // 2, 2).mean(axis=(3, 5))


def disc_block_reference(x, params, in_ch, out_ch, downsample=True):
    ch_mismatch = in_ch != out_ch
    h = jnp.maximum(x, 0.0)
    h = _conv_nchw(h, params["w1"], params["b1"], 1)
    h = jnp.maximum(h, 0.0)
    h = _conv_nchw(h, params["w2"], params["b2"], 1)
    if downsample:
        h = _avgpool2_nchw(h)
    x0 = x
    if downsample or ch_mismatch:
        x0 = _conv_nchw(x0, params["w0"], params["b0"], 0)
        if downsample:
            x0 = _avgpool2_nchw(x0)
    return h + x0


# ----------------------------------- main ------------------------------------

if __name__ == "__main__":
    # Channels picked so W*Cin=128, W*Cout=256, WO*Cout=128: every dot K/N and
    # every load/store lane width is a multiple of 128 (no masked vst, full MXU
    # tiles on v5e), and N=8 gives >= 4 pipelined grid steps.
    N, Cin, Cout, H, W = 8, 8, 16, 16, 16

    key = jax.random.PRNGKey(0)
    k_x, k_p, k_p2 = jax.random.split(key, 3)
    x = jax.random.normal(k_x, (N, Cin, H, W), jnp.float32)
    params = make_params(k_p, Cin, Cout)

    tol = dict(atol=3e-2, rtol=3e-2)   # bf16 MXU operands, f32 accumulation

    # downsample=True (default path)
    out = disc_block_forward(x, params, Cin, Cout, downsample=True)
    out = jax.block_until_ready(out)
    ref = disc_block_reference(x, params, Cin, Cout, downsample=True)
    assert out.shape == (N, Cout, H // 2, W // 2)
    assert jnp.allclose(out, ref, **tol), "downsample=True mismatch"

    # downsample=False path (shortcut conv still applied since Cin != Cout)
    out_nd = disc_block_forward(x, params, Cin, Cout, downsample=False)
    out_nd = jax.block_until_ready(out_nd)
    ref_nd = disc_block_reference(x, params, Cin, Cout, downsample=False)
    assert out_nd.shape == (N, Cout, H, W)
    assert jnp.allclose(out_nd, ref_nd, **tol), "downsample=False mismatch"

    # identity-shortcut path (Cin == Cout, no downsample)
    params_eq = make_params(k_p2, Cout, Cout)
    x_eq = jax.random.normal(k_x, (N, Cout, H, W), jnp.float32)
    out_id = disc_block_forward(x_eq, params_eq, Cout, Cout, downsample=False)
    out_id = jax.block_until_ready(out_id)
    ref_id = disc_block_reference(x_eq, params_eq, Cout, Cout, downsample=False)
    assert jnp.allclose(out_id, ref_id, **tol), "identity shortcut mismatch"

    print("KERNEL_OK")
</pallas_src>

<mosaic_0001>
module attributes {stable_mosaic.version = 11 : i64} {
  func.func @_disc_block_kernel(%arg0: i32, %arg1: memref<2x16x128xf32, #tpu.memory_space<vmem>>, %arg2: memref<3x128x256xbf16, #tpu.memory_space<vmem>>, %arg3: memref<1x256xf32, #tpu.memory_space<vmem>>, %arg4: memref<3x256x128xbf16, #tpu.memory_space<vmem>>, %arg5: memref<128x128xbf16, #tpu.memory_space<vmem>>, %arg6: memref<1x128xf32, #tpu.memory_space<vmem>>, %arg7: memref<2x8x128xf32, #tpu.memory_space<vmem>>, %arg8: memref<2x18x128xf32, #tpu.memory_space<vmem>>, %arg9: memref<2x18x256xf32, #tpu.memory_space<vmem>>) attributes {dimension_semantics = [#tpu.dimension_semantics<parallel>], iteration_bounds = array<i64: 4>, scalar_prefetch = 0 : i64, scratch_operands = 2 : i64, tpu.core_type = #tpu.core_type<tc>, window_params = [{transform_indices = @transform_0, window_bounds = array<i64: 2, 16, 128>}, {pipeline_mode = #tpu.pipeline_mode<synchronous>, transform_indices = @transform_1, window_bounds = array<i64: 3, 128, 256>}, {pipeline_mode = #tpu.pipeline_mode<synchronous>, transform_indices = @transform_2, window_bounds = array<i64: 1, 256>}, {pipeline_mode = #tpu.pipeline_mode<synchronous>, transform_indices = @transform_3, window_bounds = array<i64: 3, 256, 128>}, {pipeline_mode = #tpu.pipeline_mode<synchronous>, transform_indices = @transform_4, window_bounds = array<i64: 128, 128>}, {pipeline_mode = #tpu.pipeline_mode<synchronous>, transform_indices = @transform_5, window_bounds = array<i64: 1, 128>}, {transform_indices = @transform_6, window_bounds = array<i64: 2, 8, 128>}]} {
    %c0 = arith.constant 0 : index
    %c0_0 = arith.constant 0 : index
    %c0_1 = arith.constant 0 : index
    %0 = vector.load %arg1[%c0, %c0_0, %c0_1] : memref<2x16x128xf32, #tpu.memory_space<vmem>>, vector<2x16x128xf32>
    %cst = arith.constant 0.000000e+00 : f32
    %1 = vector.broadcast %cst : f32 to vector<2x1x128xf32>
    %c0_2 = arith.constant 0 : index
    %c0_3 = arith.constant 0 : index
    %c0_4 = arith.constant 0 : index
    %2 = vector.load %arg8[%c0_2, %c0_3, %c0_4] : memref<2x18x128xf32, #tpu.memory_space<vmem>>, vector<2x1x128xf32>
    tpu.vector_store %arg8[%c0_2, %c0_3, %c0_4], %1 {strides = array<i32>} : memref<2x18x128xf32, #tpu.memory_space<vmem>>, vector<2x1x128xf32>,
    %cst_5 = arith.constant 0.000000e+00 : f32
    %3 = vector.broadcast %cst_5 : f32 to vector<2x1x128xf32>
    %c0_6 = arith.constant 0 : index
    %c17 = arith.constant 17 : index
    %c0_7 = arith.constant 0 : index
    %4 = vector.load %arg8[%c0_6, %c17, %c0_7] : memref<2x18x128xf32, #tpu.memory_space<vmem>>, vector<2x1x128xf32>
    tpu.vector_store %arg8[%c0_6, %c17, %c0_7], %3 {strides = array<i32>} : memref<2x18x128xf32, #tpu.memory_space<vmem>>, vector<2x1x128xf32>,
    %cst_8 = arith.constant 0.000000e+00 : f32
    %5 = vector.broadcast %cst_8 : f32 to vector<2x16x128xf32>
    %6 = arith.maximumf %0, %5 : vector<2x16x128xf32>
    %c0_9 = arith.constant 0 : index
    %c1 = arith.constant 1 : index
    %c0_10 = arith.constant 0 : index
    %7 = vector.load %arg8[%c0_9, %c1, %c0_10] : memref<2x18x128xf32, #tpu.memory_space<vmem>>, vector<2x16x128xf32>
    tpu.vector_store %arg8[%c0_9, %c1, %c0_10], %6 {strides = array<i32>} : memref<2x18x128xf32, #tpu.memory_space<vmem>>, vector<2x16x128xf32>,
    %c0_11 = arith.constant 0 : index
    %c0_12 = arith.constant 0 : index
    %c0_13 = arith.constant 0 : index
    %8 = vector.load %arg8[%c0_11, %c0_12, %c0_13] : memref<2x18x128xf32, #tpu.memory_space<vmem>>, vector<2x16x128xf32>
    %9 = vector.shape_cast %8 : vector<2x16x128xf32> to vector<32x128xf32>
    %10 = arith.truncf %9 : vector<32x128xf32> to vector<32x128xbf16>
    %c0_14 = arith.constant 0 : index
    %c0_15 = arith.constant 0 : index
    %c0_16 = arith.constant 0 : index
    %11 = vector.load %arg2[%c0_14, %c0_15, %c0_16] : memref<3x128x256xbf16, #tpu.memory_space<vmem>>, vector<1x128x256xbf16>
    %12 = vector.shape_cast %11 : vector<1x128x256xbf16> to vector<128x256xbf16>
    %cst_17 = arith.constant dense<0.000000e+00> : vector<32x256xf32>
    %13 = tpu.matmul %10, %12, %cst_17 {dimension_numbers = #tpu.dot_dimension_numbers<[1], [0], [0], [1], [0, 0, 1, 1], [], []>} : vector<32x128xbf16>, vector<128x256xbf16>, vector<32x256xf32> -> vector<32x256xf32>
    %c0_18 = arith.constant 0 : index
    %c1_19 = arith.constant 1 : index
    %c0_20 = arith.constant 0 : index
    %14 = vector.load %arg8[%c0_18, %c1_19, %c0_20] : memref<2x18x128xf32, #tpu.memory_space<vmem>>, vector<2x16x128xf32>
    %15 = vector.shape_cast %14 : vector<2x16x128xf32> to vector<32x128xf32>
    %16 = arith.truncf %15 : vector<32x128xf32> to vector<32x128xbf16>
    %c1_21 = arith.constant 1 : index
    %c0_22 = arith.constant 0 : index
    %c0_23 = arith.constant 0 : index
    %17 = vector.load %arg2[%c1_21, %c0_22, %c0_23] : memref<3x128x256xbf16, #tpu.memory_space<vmem>>, vector<1x128x256xbf16>
    %18 = vector.shape_cast %17 : vector<1x128x256xbf16> to vector<128x256xbf16>
    %cst_24 = arith.constant dense<0.000000e+00> : vector<32x256xf32>
    %19 = tpu.matmul %16, %18, %cst_24 {dimension_numbers = #tpu.dot_dimension_numbers<[1], [0], [0], [1], [0, 0, 1, 1], [], []>} : vector<32x128xbf16>, vector<128x256xbf16>, vector<32x256xf32> -> vector<32x256xf32>
    %20 = arith.addf %13, %19 : vector<32x256xf32>
    %c0_25 = arith.constant 0 : index
    %c2 = arith.constant 2 : index
    %c0_26 = arith.constant 0 : index
    %21 = vector.load %arg8[%c0_25, %c2, %c0_26] : memref<2x18x128xf32, #tpu.memory_space<vmem>>, vector<2x16x128xf32>
    %22 = vector.shape_cast %21 : vector<2x16x128xf32> to vector<32x128xf32>
    %23 = arith.truncf %22 : vector<32x128xf32> to vector<32x128xbf16>
    %c2_27 = arith.constant 2 : index
    %c0_28 = arith.constant 0 : index
    %c0_29 = arith.constant 0 : index
    %24 = vector.load %arg2[%c2_27, %c0_28, %c0_29] : memref<3x128x256xbf16, #tpu.memory_space<vmem>>, vector<1x128x256xbf16>
    %25 = vector.shape_cast %24 : vector<1x128x256xbf16> to vector<128x256xbf16>
    %cst_30 = arith.constant dense<0.000000e+00> : vector<32x256xf32>
    %26 = tpu.matmul %23, %25, %cst_30 {dimension_numbers = #tpu.dot_dimension_numbers<[1], [0], [0], [1], [0, 0, 1, 1], [], []>} : vector<32x128xbf16>, vector<128x256xbf16>, vector<32x256xf32> -> vector<32x256xf32>
    %27 = arith.addf %20, %26 : vector<32x256xf32>
    %c0_31 = arith.constant 0 : index
    %c0_32 = arith.constant 0 : index
    %28 = vector.load %arg3[%c0_31, %c0_32] : memref<1x256xf32, #tpu.memory_space<vmem>>, vector<1x256xf32>
    %29 = vector.broadcast %28 : vector<1x256xf32> to vector<32x256xf32>
    %30 = arith.addf %27, %29 : vector<32x256xf32>
    %cst_33 = arith.constant 0.000000e+00 : f32
    %31 = vector.broadcast %cst_33 : f32 to vector<2x1x256xf32>
    %c0_34 = arith.constant 0 : index
    %c0_35 = arith.constant 0 : index
    %c0_36 = arith.constant 0 : index
    %32 = vector.load %arg9[%c0_34, %c0_35, %c0_36] : memref<2x18x256xf32, #tpu.memory_space<vmem>>, vector<2x1x256xf32>
    tpu.vector_store %arg9[%c0_34, %c0_35, %c0_36], %31 {strides = array<i32>} : memref<2x18x256xf32, #tpu.memory_space<vmem>>, vector<2x1x256xf32>,
    %cst_37 = arith.constant 0.000000e+00 : f32
    %33 = vector.broadcast %cst_37 : f32 to vector<2x1x256xf32>
    %c0_38 = arith.constant 0 : index
    %c17_39 = arith.constant 17 : index
    %c0_40 = arith.constant 0 : index
    %34 = vector.load %arg9[%c0_38, %c17_39, %c0_40] : memref<2x18x256xf32, #tpu.memory_space<vmem>>, vector<2x1x256xf32>
    tpu.vector_store %arg9[%c0_38, %c17_39, %c0_40], %33 {strides = array<i32>} : memref<2x18x256xf32, #tpu.memory_space<vmem>>, vector<2x1x256xf32>,
    %cst_41 = arith.constant 0.000000e+00 : f32
    %35 = vector.broadcast %cst_41 : f32 to vector<32x256xf32>
    %36 = arith.maximumf %30, %35 : vector<32x256xf32>
    %37 = vector.shape_cast %36 : vector<32x256xf32> to vector<2x16x256xf32>
    %c0_42 = arith.constant 0 : index
    %c1_43 = arith.constant 1 : index
    %c0_44 = arith.constant 0 : index
    %38 = vector.load %arg9[%c0_42, %c1_43, %c0_44] : memref<2x18x256xf32, #tpu.memory_space<vmem>>, vector<2x16x256xf32>
    tpu.vector_store %arg9[%c0_42, %c1_43, %c0_44], %37 {strides = array<i32>} : memref<2x18x256xf32, #tpu.memory_space<vmem>>, vector<2x16x256xf32>,
    %c0_45 = arith.constant 0 : index
    %c0_46 = arith.constant 0 : index
    %c0_47 = arith.constant 0 : index
    %39 = vector.load %arg9[%c0_45, %c0_46, %c0_47] : memref<2x18x256xf32, #tpu.memory_space<vmem>>, vector<2x16x256xf32>
    %40 = vector.shape_cast %39 : vector<2x16x256xf32> to vector<32x256xf32>
    %41 = arith.truncf %40 : vector<32x256xf32> to vector<32x256xbf16>
    %c0_48 = arith.constant 0 : index
    %c0_49 = arith.constant 0 : index
    %c0_50 = arith.constant 0 : index
    %42 = vector.load %arg4[%c0_48, %c0_49, %c0_50] : memref<3x256x128xbf16, #tpu.memory_space<vmem>>, vector<1x256x128xbf16>
    %43 = vector.shape_cast %42 : vector<1x256x128xbf16> to vector<256x128xbf16>
    %cst_51 = arith.constant dense<0.000000e+00> : vector<32x128xf32>
    %44 = tpu.matmul %41, %43, %cst_51 {dimension_numbers = #tpu.dot_dimension_numbers<[1], [0], [0], [1], [0, 0, 1, 1], [], []>} : vector<32x256xbf16>, vector<256x128xbf16>, vector<32x128xf32> -> vector<32x128xf32>
    %c0_52 = arith.constant 0 : index
    %c1_53 = arith.constant 1 : index
    %c0_54 = arith.constant 0 : index
    %45 = vector.load %arg9[%c0_52, %c1_53, %c0_54] : memref<2x18x256xf32, #tpu.memory_space<vmem>>, vector<2x16x256xf32>
    %46 = vector.shape_cast %45 : vector<2x16x256xf32> to vector<32x256xf32>
    %47 = arith.truncf %46 : vector<32x256xf32> to vector<32x256xbf16>
    %c1_55 = arith.constant 1 : index
    %c0_56 = arith.constant 0 : index
    %c0_57 = arith.constant 0 : index
    %48 = vector.load %arg4[%c1_55, %c0_56, %c0_57] : memref<3x256x128xbf16, #tpu.memory_space<vmem>>, vector<1x256x128xbf16>
    %49 = vector.shape_cast %48 : vector<1x256x128xbf16> to vector<256x128xbf16>
    %cst_58 = arith.constant dense<0.000000e+00> : vector<32x128xf32>
    %50 = tpu.matmul %47, %49, %cst_58 {dimension_numbers = #tpu.dot_dimension_numbers<[1], [0], [0], [1], [0, 0, 1, 1], [], []>} : vector<32x256xbf16>, vector<256x128xbf16>, vector<32x128xf32> -> vector<32x128xf32>
    %51 = arith.addf %44, %50 : vector<32x128xf32>
    %c0_59 = arith.constant 0 : index
    %c2_60 = arith.constant 2 : index
    %c0_61 = arith.constant 0 : index
    %52 = vector.load %arg9[%c0_59, %c2_60, %c0_61] : memref<2x18x256xf32, #tpu.memory_space<vmem>>, vector<2x16x256xf32>
    %53 = vector.shape_cast %52 : vector<2x16x256xf32> to vector<32x256xf32>
    %54 = arith.truncf %53 : vector<32x256xf32> to vector<32x256xbf16>
    %c2_62 = arith.constant 2 : index
    %c0_63 = arith.constant 0 : index
    %c0_64 = arith.constant 0 : index
    %55 = vector.load %arg4[%c2_62, %c0_63, %c0_64] : memref<3x256x128xbf16, #tpu.memory_space<vmem>>, vector<1x256x128xbf16>
    %56 = vector.shape_cast %55 : vector<1x256x128xbf16> to vector<256x128xbf16>
    %cst_65 = arith.constant dense<0.000000e+00> : vector<32x128xf32>
    %57 = tpu.matmul %54, %56, %cst_65 {dimension_numbers = #tpu.dot_dimension_numbers<[1], [0], [0], [1], [0, 0, 1, 1], [], []>} : vector<32x256xbf16>, vector<256x128xbf16>, vector<32x128xf32> -> vector<32x128xf32>
    %58 = arith.addf %51, %57 : vector<32x128xf32>
    %59 = vector.shape_cast %0 : vector<2x16x128xf32> to vector<32x128xf32>
    %60 = arith.truncf %59 : vector<32x128xf32> to vector<32x128xbf16>
    %c0_66 = arith.constant 0 : index
    %c0_67 = arith.constant 0 : index
    %61 = vector.load %arg5[%c0_66, %c0_67] : memref<128x128xbf16, #tpu.memory_space<vmem>>, vector<128x128xbf16>
    %cst_68 = arith.constant dense<0.000000e+00> : vector<32x128xf32>
    %62 = tpu.matmul %60, %61, %cst_68 {dimension_numbers = #tpu.dot_dimension_numbers<[1], [0], [0], [1], [0, 0, 1, 1], [], []>} : vector<32x128xbf16>, vector<128x128xbf16>, vector<32x128xf32> -> vector<32x128xf32>
    %63 = arith.addf %58, %62 : vector<32x128xf32>
    %64 = vector.shape_cast %63 : vector<32x128xf32> to vector<16x2x128xf32>
    %65 = vector.extract_strided_slice %64 {offsets = [0, 0, 0], sizes = [16, 1, 128], strides = [1, 1, 1]} : vector<16x2x128xf32> to vector<16x1x128xf32>
    %66 = vector.shape_cast %65 : vector<16x1x128xf32> to vector<16x128xf32>
    %67 = vector.extract_strided_slice %64 {offsets = [0, 1, 0], sizes = [16, 1, 128], strides = [1, 1, 1]} : vector<16x2x128xf32> to vector<16x1x128xf32>
    %68 = vector.shape_cast %67 : vector<16x1x128xf32> to vector<16x128xf32>
    %69 = arith.addf %66, %68 : vector<16x128xf32>
    %c0_69 = arith.constant 0 : index
    %c0_70 = arith.constant 0 : index
    %70 = vector.load %arg6[%c0_69, %c0_70] : memref<1x128xf32, #tpu.memory_space<vmem>>, vector<1x128xf32>
    %71 = vector.broadcast %70 : vector<1x128xf32> to vector<16x128xf32>
    %72 = arith.addf %69, %71 : vector<16x128xf32>
    %73 = vector.shape_cast %72 : vector<16x128xf32> to vector<2x8x128xf32>
    %c0_71 = arith.constant 0 : index
    %c0_72 = arith.constant 0 : index
    %c0_73 = arith.constant 0 : index
    %74 = vector.load %arg7[%c0_71, %c0_72, %c0_73] : memref<2x8x128xf32, #tpu.memory_space<vmem>>, vector<2x8x128xf32>
    tpu.vector_store %arg7[%c0_71, %c0_72, %c0_73], %73 {strides = array<i32>} : memref<2x8x128xf32, #tpu.memory_space<vmem>>, vector<2x8x128xf32>,
    return
  }
  func.func @transform_0(%arg0: i32) -> (i32, i32, i32) {
    %c0_i32 = arith.constant 0 : i32
    %c0_i32_0 = arith.constant 0 : i32
    %c0_i32_1 = arith.constant 0 : i32
    return %arg0, %c0_i32, %c0_i32_0 : i32, i32, i32
  }
  func.func @transform_1(%arg0: i32) -> (i32, i32, i32) {
    %c0_i32 = arith.constant 0 : i32
    %c0_i32_0 = arith.constant 0 : i32
    %c0_i32_1 = arith.constant 0 : i32
    %c0_i32_2 = arith.constant 0 : i32
    return %c0_i32, %c0_i32_0, %c0_i32_1 : i32, i32, i32
  }
  func.func @transform_2(%arg0: i32) -> (i32, i32) {
    %c0_i32 = arith.constant 0 : i32
    %c0_i32_0 = arith.constant 0 : i32
    %c0_i32_1 = arith.constant 0 : i32
    return %c0_i32, %c0_i32_0 : i32, i32
  }
  func.func @transform_3(%arg0: i32) -> (i32, i32, i32) {
    %c0_i32 = arith.constant 0 : i32
    %c0_i32_0 = arith.constant 0 : i32
    %c0_i32_1 = arith.constant 0 : i32
    %c0_i32_2 = arith.constant 0 : i32
    return %c0_i32, %c0_i32_0, %c0_i32_1 : i32, i32, i32
  }
  func.func @transform_4(%arg0: i32) -> (i32, i32) {
    %c0_i32 = arith.constant 0 : i32
    %c0_i32_0 = arith.constant 0 : i32
    %c0_i32_1 = arith.constant 0 : i32
    return %c0_i32, %c0_i32_0 : i32, i32
  }
  func.func @transform_5(%arg0: i32) -> (i32, i32) {
    %c0_i32 = arith.constant 0 : i32
    %c0_i32_0 = arith.constant 0 : i32
    %c0_i32_1 = arith.constant 0 : i32
    return %c0_i32, %c0_i32_0 : i32, i32
  }
  func.func @transform_6(%arg0: i32) -> (i32, i32, i32) {
    %c0_i32 = arith.constant 0 : i32
    %c0_i32_0 = arith.constant 0 : i32
    %c0_i32_1 = arith.constant 0 : i32
    return %arg0, %c0_i32, %c0_i32_0 : i32, i32, i32
  }
}

</mosaic_0001>

<llo_original>
// kernel: tpu_custom_call.1
$region0: #{tpu_custom_call.1}
  #allocation0 [shape = 'u32[]', space=smem, size = 0x4, offset = 0x4, fixed_abs, tag = 'smem constant byte address 0x4 - core index']
  #allocation1 [shape = 'u32[144,128]{1,0:T(1,128)}', space=vmem, size = 0x12000, scoped, tag = 'internal scratch']
  #allocation2 [shape = 'f32[2,18,128]{2,1,0:T(8,128)}', space=vmem, size = 0x6000, scoped, tag = 'scratch operand']
  #allocation3 [shape = 'f32[2,18,256]{2,1,0:T(8,128)}', space=vmem, size = 0xc000, scoped, tag = 'scratch operand']
  %s0 = inlined_call_operand.hbm [shape: f32[8,16,128], index: 0, kind: input, shape index: {}]
  %s1 = inlined_call_operand.hbm [shape: bf16[3,128,256], index: 1, kind: input, shape index: {}]
  %s2 = inlined_call_operand.vmem [shape: f32[1,256], index: 2, kind: input, shape index: {}]
  %s3 = inlined_call_operand.hbm [shape: bf16[3,256,128], index: 3, kind: input, shape index: {}]
  %s4 = inlined_call_operand.hbm [shape: bf16[128,128], index: 4, kind: input, shape index: {}]
  %s5 = inlined_call_operand.vmem [shape: f32[1,128], index: 5, kind: input, shape index: {}]
  %s6 = inlined_call_operand.hbm [shape: f32[8,8,128], index: 6, kind: output, shape index: {}]
  %s7 = sld [smem:[#allocation0]]
  $region73: #{tpu_custom_call.1} parent=0
    _
  %s9 = ssub.s32 1, %s7
  %s10 = scalar_select 0, %s9, %s7
  $region1: #{tpu_custom_call.1} parent=0
    #allocation4 [shape = 'u8[32768]{0}', space=vmem, size = 0x8000, scoped, tag = 'input window, operand 0']
    #allocation5 [shape = 's32[2]{0}', space=sflag, size = 0x8, scoped, tag = 'scoped memory for tpu_custom_call.1']
    #allocation6 [shape = 's32[2]{0}', space=sflag, size = 0x8, scoped, tag = 'scoped memory for tpu_custom_call.1']
    #allocation7 [shape = 'u8[196608]{0}', space=vmem, size = 0x30000, scoped, tag = 'input window, operand 1, single buffered']
    #allocation8 [shape = 's32[1]{0}', space=sflag, size = 0x4, scoped, tag = 'scoped memory for tpu_custom_call.1']
    #allocation9 [shape = 'u8[196608]{0}', space=vmem, size = 0x30000, scoped, tag = 'input window, operand 3, single buffered']
    #allocation10 [shape = 'u8[32768]{0}', space=vmem, size = 0x8000, scoped, tag = 'input window, operand 4, single buffered']
    #allocation11 [shape = 's32[1]{0}', space=sflag, size = 0x4, scoped, tag = 'scoped memory for tpu_custom_call.1']
    #allocation12 [shape = 'u8[16384]{0}', space=vmem, size = 0x4000, scoped, tag = 'output window, operand 0']
    %11 = vsyncpa [#allocation5], 0
    %s12 = scalar_lea.sflag [#allocation5], 1
    %13 = vsyncpa %s12, 0
    %14 = vsyncpa [#allocation8], 0
    %15 = vsyncpa [#allocation11], 0
    %16 = vsyncpa [#allocation6], 0
    %s17 = scalar_lea.sflag [#allocation6], 1
    %18 = vsyncpa %s17, 0
    loop: start=0, step=1, limit=6
    $region2: #{tpu_custom_call.1} parent=1 // loop_pre_header
      _
    $region3: #{tpu_custom_call.1} parent=1 // loop_header
      %s20 = sphi 0, %s24
      %p21 = scmp.ge.s32.totalorder %s20, 6
      %s30 = sphi 0, %s32
      %s33 = sphi 0, %s30
      %s34 = sphi 0, %s33
      %s50 = sphi 0, %s34
      %s54 = sphi 0, %s54
      %s56 = sphi 0, %s54
      %s57 = sphi 0, %s56
      %s71 = sphi 0, %s57
      %s75 = sphi 0, %s75
      %s77 = sphi 0, %s75
      %s78 = sphi 0, %s77
      %s92 = sphi 0, %s78
      %s96 = sphi 0, %s96
      %s98 = sphi 0, %s96
      %s99 = sphi 0, %s98
      %s113 = sphi 0, %s99
      %s117 = sphi 0, %s117
      %s119 = sphi 0, %s117
      %s120 = sphi 0, %s119
      %s134 = sphi 0, %s120
      %s138 = sphi 0, %s138
      %s140 = sphi 0, %s138
      %s141 = sphi 0, %s140
      %s155 = sphi 0, %s141
      %s161 = sphi 0, %s163
      %s164 = sphi 0, %s161
      %s165 = sphi 0, %s164
      %s181 = sphi 0, %s165
    $region4: #{tpu_custom_call.1} parent=1 // loop_header_branch
      %23 = sbr.rel (%p21) target = $region8
    $region5: #{tpu_custom_call.1} parent=1 // loop_body
      %s25 = ssub.s32 %s20, 1
      %s26 = ssub.s32 %s20, 2
      %s27 = sadd.s32 %s20, 1
      %s28 = ssub.s32 %s20, %s27
      %p29 = scmp.eq.s32.totalorder %s28, 0
      %s31 = sadd.s32 %s30, 1
      %s32 = scalar_select %p29, %s30, %s31
      %p35 = pneg %p29
      %p36 = scmp.eq.s32.totalorder %s20, 3
      %p37 = por %p35, %p36
      %p38 = scmp.ne.s32.totalorder %s30, %s33
      %p39 = scmp.eq.s32.totalorder %s20, 0
      %p40 = por %p38, %p39
      %p41 = scmp.ne.s32.totalorder %s30, %s33
      %p42 = scmp.eq.s32.totalorder %s25, 3
      %p43 = por %p41, %p42
      %p44 = scmp.ne.s32.totalorder %s33, %s34
      %p45 = scmp.eq.s32.totalorder %s25, 0
      %p46 = por %p44, %p45
      %p47 = scmp.ne.s32.totalorder %s33, %s34
      %p48 = scmp.eq.s32.totalorder %s26, 3
      %p49 = por %p47, %p48
      %p51 = scmp.ne.s32.totalorder %s34, %s50
      %p52 = scmp.eq.s32.totalorder %s26, 0
      %p53 = por %p51, %p52
      %s55 = sadd.s32 %s54, 1
      %p58 = scmp.eq.s32.totalorder %s20, 3
      %p59 = scmp.ne.s32.totalorder %s54, %s56
      %p60 = scmp.eq.s32.totalorder %s20, 0
      %p61 = por %p59, %p60
      %p62 = scmp.ne.s32.totalorder %s54, %s56
      %p63 = scmp.eq.s32.totalorder %s25, 3
      %p64 = por %p62, %p63
      %p65 = scmp.ne.s32.totalorder %s56, %s57
      %p66 = scmp.eq.s32.totalorder %s25, 0
      %p67 = por %p65, %p66
      %p68 = scmp.ne.s32.totalorder %s56, %s57
      %p69 = scmp.eq.s32.totalorder %s26, 3
      %p70 = por %p68, %p69
      %p72 = scmp.ne.s32.totalorder %s57, %s71
      %p73 = scmp.eq.s32.totalorder %s26, 0
      %p74 = por %p72, %p73
      %s76 = sadd.s32 %s75, 1
      %p79 = scmp.eq.s32.totalorder %s20, 3
      %p80 = scmp.ne.s32.totalorder %s75, %s77
      %p81 = scmp.eq.s32.totalorder %s20, 0
      %p82 = por %p80, %p81
      %p83 = scmp.ne.s32.totalorder %s75, %s77
      %p84 = scmp.eq.s32.totalorder %s25, 3
      %p85 = por %p83, %p84
      %p86 = scmp.ne.s32.totalorder %s77, %s78
      %p87 = scmp.eq.s32.totalorder %s25, 0
      %p88 = por %p86, %p87
      %p89 = scmp.ne.s32.totalorder %s77, %s78
      %p90 = scmp.eq.s32.totalorder %s26, 3
      %p91 = por %p89, %p90
      %p93 = scmp.ne.s32.totalorder %s78, %s92
      %p94 = scmp.eq.s32.totalorder %s26, 0
      %p95 = por %p93, %p94
      %s97 = sadd.s32 %s96, 1
      %p100 = scmp.eq.s32.totalorder %s20, 3
      %p101 = scmp.ne.s32.totalorder %s96, %s98
      %p102 = scmp.eq.s32.totalorder %s20, 0
      %p103 = por %p101, %p102
      %p104 = scmp.ne.s32.totalorder %s96, %s98
      %p105 = scmp.eq.s32.totalorder %s25, 3
      %p106 = por %p104, %p105
      %p107 = scmp.ne.s32.totalorder %s98, %s99
      %p108 = scmp.eq.s32.totalorder %s25, 0
      %p109 = por %p107, %p108
      %p110 = scmp.ne.s32.totalorder %s98, %s99
      %p111 = scmp.eq.s32.totalorder %s26, 3
      %p112 = por %p110, %p111
      %p114 = scmp.ne.s32.totalorder %s99, %s113
      %p115 = scmp.eq.s32.totalorder %s26, 0
      %p116 = por %p114, %p115
      %s118 = sadd.s32 %s117, 1
      %p121 = scmp.eq.s32.totalorder %s20, 3
      %p122 = scmp.ne.s32.totalorder %s117, %s119
      %p123 = scmp.eq.s32.totalorder %s20, 0
      %p124 = por %p122, %p123
      %p125 = scmp.ne.s32.totalorder %s117, %s119
      %p126 = scmp.eq.s32.totalorder %s25, 3
      %p127 = por %p125, %p126
      %p128 = scmp.ne.s32.totalorder %s119, %s120
      %p129 = scmp.eq.s32.totalorder %s25, 0
      %p130 = por %p128, %p129
      %p131 = scmp.ne.s32.totalorder %s119, %s120
      %p132 = scmp.eq.s32.totalorder %s26, 3
      %p133 = por %p131, %p132
      %p135 = scmp.ne.s32.totalorder %s120, %s134
      %p136 = scmp.eq.s32.totalorder %s26, 0
      %p137 = por %p135, %p136
      %s139 = sadd.s32 %s138, 1
      %p142 = scmp.eq.s32.totalorder %s20, 3
      %p143 = scmp.ne.s32.totalorder %s138, %s140
      %p144 = scmp.eq.s32.totalorder %s20, 0
      %p145 = por %p143, %p144
      %p146 = scmp.ne.s32.totalorder %s138, %s140
      %p147 = scmp.eq.s32.totalorder %s25, 3
      %p148 = por %p146, %p147
      %p149 = scmp.ne.s32.totalorder %s140, %s141
      %p150 = scmp.eq.s32.totalorder %s25, 0
      %p151 = por %p149, %p150
      %p152 = scmp.ne.s32.totalorder %s140, %s141
      %p153 = scmp.eq.s32.totalorder %s26, 3
      %p154 = por %p152, %p153
      %p156 = scmp.ne.s32.totalorder %s141, %s155
      %p157 = scmp.eq.s32.totalorder %s26, 0
      %p158 = por %p156, %p157
      %s159 = ssub.s32 %s20, %s27
      %p160 = scmp.eq.s32.totalorder %s159, 0
      %s162 = sadd.s32 %s161, 1
      %s163 = scalar_select %p160, %s161, %s162
      %p166 = pneg %p160
      %p167 = scmp.eq.s32.totalorder %s20, 3
      %p168 = por %p166, %p167
      %p169 = scmp.ne.s32.totalorder %s161, %s164
      %p170 = scmp.eq.s32.totalorder %s20, 0
      %p171 = por %p169, %p170
      %p172 = scmp.ne.s32.totalorder %s161, %s164
      %p173 = scmp.eq.s32.totalorder %s25, 3
      %p174 = por %p172, %p173
      %p175 = scmp.ne.s32.totalorder %s164, %s165
      %p176 = scmp.eq.s32.totalorder %s25, 0
      %p177 = por %p175, %p176
      %p178 = scmp.ne.s32.totalorder %s164, %s165
      %p179 = scmp.eq.s32.totalorder %s26, 3
      %p180 = por %p178, %p179
      %p182 = scmp.ne.s32.totalorder %s165, %s181
      %p183 = scmp.eq.s32.totalorder %s26, 0
      %p184 = por %p182, %p183
      %p185 = scmp.le.s32.totalorder 1, %s20
      %p186 = scmp.lt.s32.totalorder %s20, 5
      %p187 = pnand %p185, %p186
      %p188 = pneg %p187
      // Predicated region
      $region9: #{tpu_custom_call.1} parent=5 // pred_check
        _
      $region10: #{tpu_custom_call.1} parent=5 // pred_check_branch
        %190 = sbr.rel (%p187) target = $region12
      $region11: #{tpu_custom_call.1} parent=5 // pred_region
        %s191 = ssub.s32 %s20, 1
        // Predicated region
        $region13: #{tpu_custom_call.1} parent=11 // pred_check
          %p192 = pneg %p67
        $region14: #{tpu_custom_call.1} parent=11 // pred_check_branch
          %194 = sbr.rel (%p192) target = $region16
        $region15: #{tpu_custom_call.1} parent=11 // pred_region
          %s196 = ssub.s32 6144, 6144
          %197 = vsyncadd [#allocation8], %s196
          %s198 = sshll.u32 [#allocation7], 4
          %s199 = int_to_ptr.vmem [resolvable:$true] %s198
          %204 = dma.hbm_to_vmem [thread:$0]  %s1, 6144, %s199, [#allocation8], 128, 128, 8
        $region16: #{tpu_custom_call.1} parent=11 // pred_fallthru
          _
        // Predicated region
        $region17: #{tpu_custom_call.1} parent=11 // pred_check
          %p205 = pneg %p88
        $region18: #{tpu_custom_call.1} parent=11 // pred_check_branch
          %207 = sbr.rel (%p205) target = $region20
        $region19: #{tpu_custom_call.1} parent=11 // pred_region
          _
        $region20: #{tpu_custom_call.1} parent=11 // pred_fallthru
          _
        // Predicated region
        $region21: #{tpu_custom_call.1} parent=11 // pred_check
          %p208 = pneg %p109
        $region22: #{tpu_custom_call.1} parent=11 // pred_check_branch
          %210 = sbr.rel (%p208) target = $region24
        $region23: #{tpu_custom_call.1} parent=11 // pred_region
          %s212 = ssub.s32 6144, 6144
          %213 = vsyncadd [#allocation8], %s212
          %s214 = sshll.u32 [#allocation9], 4
          %s215 = int_to_ptr.vmem [resolvable:$true] %s214
          %220 = dma.hbm_to_vmem [thread:$0]  %s3, 6144, %s215, [#allocation8], 64, 64, 4
        $region24: #{tpu_custom_call.1} parent=11 // pred_fallthru
          _
        // Predicated region
        $region25: #{tpu_custom_call.1} parent=11 // pred_check
          %p221 = pneg %p130
        $region26: #{tpu_custom_call.1} parent=11 // pred_check_branch
          %223 = sbr.rel (%p221) target = $region28
        $region27: #{tpu_custom_call.1} parent=11 // pred_region
          %s225 = ssub.s32 1024, 1024
          %226 = vsyncadd [#allocation11], %s225
          %s227 = sshll.u32 [#allocation10], 4
          %s228 = int_to_ptr.vmem [resolvable:$true] %s227
          %233 = dma.hbm_to_vmem [thread:$0]  %s4, 1024, %s228, [#allocation11], 64, 64, 4
        $region28: #{tpu_custom_call.1} parent=11 // pred_fallthru
          _
        // Predicated region
        $region29: #{tpu_custom_call.1} parent=11 // pred_check
          %p234 = pneg %p151
        $region30: #{tpu_custom_call.1} parent=11 // pred_check_branch
          %236 = sbr.rel (%p234) target = $region32
        $region31: #{tpu_custom_call.1} parent=11 // pred_region
          _
        $region32: #{tpu_custom_call.1} parent=11 // pred_fallthru
          _
      $region12: #{tpu_custom_call.1} parent=5 // pred_fallthru
        _
      %p237 = scmp.lt.s32.totalorder %s20, 4
      // Predicated region
      $region33: #{tpu_custom_call.1} parent=5 // pred_check
        %p238 = pneg %p237
      $region34: #{tpu_custom_call.1} parent=5 // pred_check_branch
        %240 = sbr.rel (%p238) target = $region36
      $region35: #{tpu_custom_call.1} parent=5 // pred_region
        // Predicated region
        $region37: #{tpu_custom_call.1} parent=35 // pred_check
          %p241 = pneg %p40
        $region38: #{tpu_custom_call.1} parent=35 // pred_check_branch
          %243 = sbr.rel (%p241) target = $region40
        $region39: #{tpu_custom_call.1} parent=35 // pred_region
          %s244 = sand.u32 %s30, 1
          %s245 = scalar_lea.sflag [#allocation5], %s244
          %s246 = sand.u32 %s30, 1
          %s247 = smul.addr %s246, 32
          %s248 = scalar_lea.vmem [#allocation4], %s247
          %s249 = smul.u32 2, %s20
          %s251 = ssub.s32 512, 512
          %252 = vsyncadd %s245, %s251
          %s253 = smul.addr %s249, 2
          %s254 = smul.addr %s253, 128
          %s255 = scalar_lea.hbm %s0, %s254
          %s256 = sshll.u32 %s248, 4
          %s257 = int_to_ptr.vmem [resolvable:$true] %s256
          %262 = dma.hbm_to_vmem [thread:$0]  %s255, 512, %s257, %s245, 128, 128, 8
        $region40: #{tpu_custom_call.1} parent=35 // pred_fallthru
          _
      $region36: #{tpu_custom_call.1} parent=5 // pred_fallthru
        _
      %p263 = scmp.le.s32.totalorder 1, %s20
      %p264 = scmp.lt.s32.totalorder %s20, 5
      %p265 = pnand %p263, %p264
      %p266 = pneg %p265
      // Predicated region
      $region41: #{tpu_custom_call.1} parent=5 // pred_check
        _
      $region42: #{tpu_custom_call.1} parent=5 // pred_check_branch
        %268 = sbr.rel (%p265) target = $region44
      $region43: #{tpu_custom_call.1} parent=5 // pred_region
        %s269 = ssub.s32 %s20, 1
        %s270 = sand.u32 %s33, 1
        %s271 = scalar_lea.sflag [#allocation5], %s270
        %s272 = sand.u32 %s33, 1
        %s273 = smul.addr %s272, 32
        %s274 = scalar_lea.vmem [#allocation4], %s273
        // Predicated region
        $region45: #{tpu_custom_call.1} parent=43 // pred_check
          %p275 = pneg %p46
        $region46: #{tpu_custom_call.1} parent=43 // pred_check_branch
          %277 = sbr.rel (%p275) target = $region48
        $region47: #{tpu_custom_call.1} parent=43 // pred_region
          %278 = dma.done %s271, 512
        $region48: #{tpu_custom_call.1} parent=43 // pred_fallthru
          _
        // Predicated region
        $region49: #{tpu_custom_call.1} parent=43 // pred_check
          %p279 = pneg %p67
        $region50: #{tpu_custom_call.1} parent=43 // pred_check_branch
          %281 = sbr.rel (%p279) target = $region52
        $region51: #{tpu_custom_call.1} parent=43 // pred_region
          %282 = dma.done [#allocation8], 6144
        $region52: #{tpu_custom_call.1} parent=43 // pred_fallthru
          _
        // Predicated region
        $region53: #{tpu_custom_call.1} parent=43 // pred_check
          %p283 = pneg %p109
        $region54: #{tpu_custom_call.1} parent=43 // pred_check_branch
          %285 = sbr.rel (%p283) target = $region56
        $region55: #{tpu_custom_call.1} parent=43 // pred_region
          %286 = dma.done [#allocation8], 6144
        $region56: #{tpu_custom_call.1} parent=43 // pred_fallthru
          _
        // Predicated region
        $region57: #{tpu_custom_call.1} parent=43 // pred_check
          %p287 = pneg %p130
        $region58: #{tpu_custom_call.1} parent=43 // pred_check_branch
          %289 = sbr.rel (%p287) target = $region60
        $region59: #{tpu_custom_call.1} parent=43 // pred_region
          %290 = dma.done [#allocation11], 1024
        $region60: #{tpu_custom_call.1} parent=43 // pred_fallthru
          _
        %s291 = sand.u32 %s33, 1
        %s292 = scalar_lea.sflag [#allocation5], %s291
        %s293 = sand.u32 %s33, 1
        %s294 = smul.addr %s293, 32
        %s295 = scalar_lea.vmem [#allocation4], %s294
        %p296 = pneg %p46
        %p297 = pneg %p43
        %p298 = pneg %p67
        %p299 = pneg %p64
        %p300 = pneg %p88
        %p301 = pneg %p85
        %p302 = pneg %p109
        %p303 = pneg %p106
        %p304 = pneg %p130
        %p305 = pneg %p127
        %p306 = pneg %p151
        %p307 = pneg %p148
        %p308 = pneg %p177
        %p309 = pneg %p174
        %s310 = sand.u32 %s164, 1
        %s311 = scalar_lea.sflag [#allocation6], %s310
        %s312 = sand.u32 %s164, 1
        %s313 = smul.addr %s312, 16
        %s314 = scalar_lea.vmem [#allocation12], %s313
        %s315 = smul.u32 2, %s25
        %s316 = smul.u32 2, %s25
        %v318 = vld [vmem:[%s274] sm:$0xff]
        %v319 = vld [vmem:[%s274 + $0x8] sm:$0xff]
        %v320 = vld [vmem:[%s274 + $0x10] sm:$0xff]
        %v321 = vld [vmem:[%s274 + $0x18] sm:$0xff]
        %322 = vst [vmem:[#allocation2] sm:$0x1] 0.0
        %323 = vst [vmem:[#allocation2 + $0x18] sm:$0x1] 0.0
        %324 = vst [vmem:[#allocation2 + $0x11] sm:$0x1] 0.0
        %325 = vst [vmem:[#allocation2 + $0x29] sm:$0x1] 0.0
        %v326 = vmax.f32 %v318, 0.0
        %v327 = vmax.f32 %v319, 0.0
        %v328 = vmax.f32 %v320, 0.0
        %v329 = vmax.f32 %v321, 0.0
        %330 = vst [vmem:[#allocation2 + $0x1] sm:$0xff] %v326
        %331 = vst [vmem:[#allocation2 + $0x9] sm:$0xff] %v327
        %332 = vst [vmem:[#allocation2 + $0x19] sm:$0xff] %v328
        %333 = vst [vmem:[#allocation2 + $0x21] sm:$0xff] %v329
        %v334 = vld [vmem:[#allocation2] sm:$0xff]
        %v335 = vld [vmem:[#allocation2 + $0x8] sm:$0xff]
        %v336 = vld [vmem:[#allocation2 + $0x18] sm:$0xff]
        %v337 = vld [vmem:[#allocation2 + $0x20] sm:$0xff]
        %v338 = vpack.c.bf16 %v335, %v334
        %v339 = vpack.c.bf16 %v337, %v336
        %v340 = vld [vmem:[#allocation7] sm:$0xff]
        %v341 = vld [vmem:[#allocation7 + $0x8] sm:$0xff]
        %v342 = vld [vmem:[#allocation7 + $0x10] sm:$0xff]
        %v343 = vld [vmem:[#allocation7 + $0x18] sm:$0xff]
        %v344 = vld [vmem:[#allocation7 + $0x20] sm:$0xff]
        %v345 = vld [vmem:[#allocation7 + $0x28] sm:$0xff]
        %v346 = vld [vmem:[#allocation7 + $0x30] sm:$0xff]
        %v347 = vld [vmem:[#allocation7 + $0x38] sm:$0xff]
        %v348 = vld [vmem:[#allocation7 + $0x40] sm:$0xff]
        %v349 = vld [vmem:[#allocation7 + $0x48] sm:$0xff]
        %v350 = vld [vmem:[#allocation7 + $0x50] sm:$0xff]
        %v351 = vld [vmem:[#allocation7 + $0x58] sm:$0xff]
        %v352 = vld [vmem:[#allocation7 + $0x60] sm:$0xff]
        %v353 = vld [vmem:[#allocation7 + $0x68] sm:$0xff]
        %v354 = vld [vmem:[#allocation7 + $0x70] sm:$0xff]
        %v355 = vld [vmem:[#allocation7 + $0x78] sm:$0xff]
        %v356 = vld [vmem:[#allocation2 + $0x1] sm:$0xff]
        %v357 = vld [vmem:[#allocation2 + $0x9] sm:$0xff]
        %v358 = vld [vmem:[#allocation2 + $0x19] sm:$0xff]
        %v359 = vld [vmem:[#allocation2 + $0x21] sm:$0xff]
        %v360 = vpack.c.bf16 %v357, %v356
        %v361 = vpack.c.bf16 %v359, %v358
        %s362 = scalar_lea.vmem [#allocation7], 128
        %v363 = vld [vmem:[%s362] sm:$0xff]
        %v364 = vld [vmem:[%s362 + $0x8] sm:$0xff]
        %v365 = vld [vmem:[%s362 + $0x10] sm:$0xff]
        %v366 = vld [vmem:[%s362 + $0x18] sm:$0xff]
        %v367 = vld [vmem:[%s362 + $0x20] sm:$0xff]
        %v368 = vld [vmem:[%s362 + $0x28] sm:$0xff]
        %v369 = vld [vmem:[%s362 + $0x30] sm:$0xff]
        %v370 = vld [vmem:[%s362 + $0x38] sm:$0xff]
        %v371 = vld [vmem:[%s362 + $0x40] sm:$0xff]
        %v372 = vld [vmem:[%s362 + $0x48] sm:$0xff]
        %v373 = vld [vmem:[%s362 + $0x50] sm:$0xff]
        %v374 = vld [vmem:[%s362 + $0x58] sm:$0xff]
        %v375 = vld [vmem:[%s362 + $0x60] sm:$0xff]
        %v376 = vld [vmem:[%s362 + $0x68] sm:$0xff]
        %v377 = vld [vmem:[%s362 + $0x70] sm:$0xff]
        %v378 = vld [vmem:[%s362 + $0x78] sm:$0xff]
        %v395 = vunpack.c.l.b16 %v363
        %v396 = vunpack.c.h.b16 %v363
        %v397 = vunpack.c.l.b16 %v364
        %v398 = vunpack.c.h.b16 %v364
        %v399 = vunpack.c.l.b16 %v365
        %v400 = vunpack.c.h.b16 %v365
        %v401 = vunpack.c.l.b16 %v366
        %v402 = vunpack.c.h.b16 %v366
        %v403 = vunpack.c.l.b16 %v367
        %v404 = vunpack.c.h.b16 %v367
        %v405 = vunpack.c.l.b16 %v368
        %v406 = vunpack.c.h.b16 %v368
        %v407 = vunpack.c.l.b16 %v369
        %v408 = vunpack.c.h.b16 %v369
        %v409 = vunpack.c.l.b16 %v370
        %v410 = vunpack.c.h.b16 %v370
        %v411 = vunpack.c.l.b16 %v371
        %v412 = vunpack.c.h.b16 %v371
        %v413 = vunpack.c.l.b16 %v372
        %v414 = vunpack.c.h.b16 %v372
        %v415 = vunpack.c.l.b16 %v373
        %v416 = vunpack.c.h.b16 %v373
        %v417 = vunpack.c.l.b16 %v374
        %v418 = vunpack.c.h.b16 %v374
        %v419 = vunpack.c.l.b16 %v375
        %v420 = vunpack.c.h.b16 %v375
        %v421 = vunpack.c.l.b16 %v376
        %v422 = vunpack.c.h.b16 %v376
        %v423 = vunpack.c.l.b16 %v377
        %v424 = vunpack.c.h.b16 %v377
        %v425 = vunpack.c.l.b16 %v378
        %v426 = vunpack.c.h.b16 %v378
        %v427 = vpack.c.b16 %v397, %v395
        %v428 = vpack.c.b16 %v398, %v396
        %v429 = vpack.c.b16 %v401, %v399
        %v430 = vpack.c.b16 %v402, %v400
        %v431 = vpack.c.b16 %v405, %v403
        %v432 = vpack.c.b16 %v406, %v404
        %v433 = vpack.c.b16 %v409, %v407
        %v434 = vpack.c.b16 %v410, %v408
        %v435 = vpack.c.b16 %v413, %v411
        %v436 = vpack.c.b16 %v414, %v412
        %v437 = vpack.c.b16 %v417, %v415
        %v438 = vpack.c.b16 %v418, %v416
        %v439 = vpack.c.b16 %v421, %v419
        %v440 = vpack.c.b16 %v422, %v420
        %v441 = vpack.c.b16 %v425, %v423
        %v442 = vpack.c.b16 %v426, %v424
        %459 = vmatprep.subr.bf16.mxu0 %v428
        %460 = vmatpush1.bf16.msra.mxu0 %v427
        %461 = vmatprep.subr.bf16.mxu0 %v430
        %462 = vmatpush1.bf16.msra.mxu0 %v429
        %463 = vmatprep.subr.bf16.mxu0 %v432
        %464 = vmatpush1.bf16.msra.mxu0 %v431
        %465 = vmatprep.subr.bf16.mxu0 %v434
        %466 = vmatpush1.bf16.msra.mxu0 %v433
        %467 = vmatprep.subr.bf16.mxu0 %v436
        %468 = vmatpush1.bf16.msra.mxu0 %v435
        %469 = vmatprep.subr.bf16.mxu0 %v438
        %470 = vmatpush1.bf16.msra.mxu0 %v437
        %471 = vmatprep.subr.bf16.mxu0 %v440
        %472 = vmatpush1.bf16.msra.mxu0 %v439
        %473 = vmatprep.subr.bf16.mxu0 %v442
        %474 = vmatpush1.bf16.msra.mxu0 %v441
        %475 = vmatprep.subr.bf16.mxu0 0
        %476 = vmatpush1.bf16.msra.mxu0 0
        %477 = vmatprep.subr.bf16.mxu0 0
        %478 = vmatpush1.bf16.msra.mxu0 0
        %479 = vmatprep.subr.bf16.mxu0 0
        %480 = vmatpush1.bf16.msra.mxu0 0
        %481 = vmatprep.subr.bf16.mxu0 0
        %482 = vmatpush1.bf16.msra.mxu0 0
        %483 = vmatprep.subr.bf16.mxu0 0
        %484 = vmatpush1.bf16.msra.mxu0 0
        %485 = vmatprep.subr.bf16.mxu0 0
        %486 = vmatpush1.bf16.msra.mxu0 0
        %487 = vmatprep.subr.bf16.mxu0 0
        %488 = vmatpush1.bf16.msra.mxu0 0
        %489 = vmatprep.subr.bf16.mxu0 0
        %490 = vmatpush1.bf16.msra.mxu0 0
        %491 = vmatprep.mubr.bf16.mxu0 0
        %492 = vmatmul.mubr.bf16.gmra.mrb[0].mxu0 %v360
        %v493 = vpop.f32.mrb[0].mxu0
        %v494 = vadd.f32 0.0, %v493
        %v495 = vpop.f32.mrb[0].mxu0
        %v496 = vadd.f32 0.0, %v495
        %v497 = vpop.f32.mrb[0].mxu0
        %v498 = vadd.f32 0.0, %v497
        %v499 = vpop.f32.mrb[0].mxu0
        %v500 = vadd.f32 0.0, %v499
        %501 = vmatprep.mubr.bf16.mxu0 0
        %502 = vmatmul.mubr.bf16.gmra.mrb[0].mxu0 %v361
        %v503 = vpop.f32.mrb[0].mxu0
        %v504 = vadd.f32 0.0, %v503
        %v505 = vpop.f32.mrb[0].mxu0
        %v506 = vadd.f32 0.0, %v505
        %v507 = vpop.f32.mrb[0].mxu0
        %v508 = vadd.f32 0.0, %v507
        %v509 = vpop.f32.mrb[0].mxu0
        %v510 = vadd.f32 0.0, %v509
        %511 = vdwg.mxu0
        %v528 = vunpack.c.l.b16 %v340
        %v529 = vunpack.c.h.b16 %v340
        %v530 = vunpack.c.l.b16 %v341
        %v531 = vunpack.c.h.b16 %v341
        %v532 = vunpack.c.l.b16 %v342
        %v533 = vunpack.c.h.b16 %v342
        %v534 = vunpack.c.l.b16 %v343
        %v535 = vunpack.c.h.b16 %v343
        %v536 = vunpack.c.l.b16 %v344
        %v537 = vunpack.c.h.b16 %v344
        %v538 = vunpack.c.l.b16 %v345
        %v539 = vunpack.c.h.b16 %v345
        %v540 = vunpack.c.l.b16 %v346
        %v541 = vunpack.c.h.b16 %v346
        %v542 = vunpack.c.l.b16 %v347
        %v543 = vunpack.c.h.b16 %v347
        %v544 = vunpack.c.l.b16 %v348
        %v545 = vunpack.c.h.b16 %v348
        %v546 = vunpack.c.l.b16 %v349
        %v547 = vunpack.c.h.b16 %v349
        %v548 = vunpack.c.l.b16 %v350
        %v549 = vunpack.c.h.b16 %v350
        %v550 = vunpack.c.l.b16 %v351
        %v551 = vunpack.c.h.b16 %v351
        %v552 = vunpack.c.l.b16 %v352
        %v553 = vunpack.c.h.b16 %v352
        %v554 = vunpack.c.l.b16 %v353
        %v555 = vunpack.c.h.b16 %v353
        %v556 = vunpack.c.l.b16 %v354
        %v557 = vunpack.c.h.b16 %v354
        %v558 = vunpack.c.l.b16 %v355
        %v559 = vunpack.c.h.b16 %v355
        %v560 = vpack.c.b16 %v530, %v528
        %v561 = vpack.c.b16 %v531, %v529
        %v562 = vpack.c.b16 %v534, %v532
        %v563 = vpack.c.b16 %v535, %v533
        %v564 = vpack.c.b16 %v538, %v536
        %v565 = vpack.c.b16 %v539, %v537
        %v566 = vpack.c.b16 %v542, %v540
        %v567 = vpack.c.b16 %v543, %v541
        %v568 = vpack.c.b16 %v546, %v544
        %v569 = vpack.c.b16 %v547, %v545
        %v570 = vpack.c.b16 %v550, %v548
        %v571 = vpack.c.b16 %v551, %v549
        %v572 = vpack.c.b16 %v554, %v552
        %v573 = vpack.c.b16 %v555, %v553
        %v574 = vpack.c.b16 %v558, %v556
        %v575 = vpack.c.b16 %v559, %v557
        %592 = vmatprep.subr.bf16.mxu0 %v561
        %593 = vmatpush1.bf16.msra.mxu0 %v560
        %594 = vmatprep.subr.bf16.mxu0 %v563
        %595 = vmatpush1.bf16.msra.mxu0 %v562
        %596 = vmatprep.subr.bf16.mxu0 %v565
        %597 = vmatpush1.bf16.msra.mxu0 %v564
        %598 = vmatprep.subr.bf16.mxu0 %v567
        %599 = vmatpush1.bf16.msra.mxu0 %v566
        %600 = vmatprep.subr.bf16.mxu0 %v569
        %601 = vmatpush1.bf16.msra.mxu0 %v568
        %602 = vmatprep.subr.bf16.mxu0 %v571
        %603 = vmatpush1.bf16.msra.mxu0 %v570
        %604 = vmatprep.subr.bf16.mxu0 %v573
        %605 = vmatpush1.bf16.msra.mxu0 %v572
        %606 = vmatprep.subr.bf16.mxu0 %v575
        %607 = vmatpush1.bf16.msra.mxu0 %v574
        %608 = vmatprep.subr.bf16.mxu0 0
        %609 = vmatpush1.bf16.msra.mxu0 0
        %610 = vmatprep.subr.bf16.mxu0 0
        %611 = vmatpush1.bf16.msra.mxu0 0
        %612 = vmatprep.subr.bf16.mxu0 0
        %613 = vmatpush1.bf16.msra.mxu0 0
        %614 = vmatprep.subr.bf16.mxu0 0
        %615 = vmatpush1.bf16.msra.mxu0 0
        %616 = vmatprep.subr.bf16.mxu0 0
        %617 = vmatpush1.bf16.msra.mxu0 0
        %618 = vmatprep.subr.bf16.mxu0 0
        %619 = vmatpush1.bf16.msra.mxu0 0
        %620 = vmatprep.subr.bf16.mxu0 0
        %621 = vmatpush1.bf16.msra.mxu0 0
        %622 = vmatprep.subr.bf16.mxu0 0
        %623 = vmatpush1.bf16.msra.mxu0 0
        %624 = vmatprep.mubr.bf16.mxu0 0
        %625 = vmatmul.mubr.bf16.gmra.mrb[0].mxu0 %v338
        %v626 = vpop.f32.mrb[0].mxu0
        %v627 = vadd.f32 %v494, %v626
        %v628 = vpop.f32.mrb[0].mxu0
        %v629 = vadd.f32 %v496, %v628
        %v630 = vpop.f32.mrb[0].mxu0
        %v631 = vadd.f32 %v498, %v630
        %v632 = vpop.f32.mrb[0].mxu0
        %v633 = vadd.f32 %v500, %v632
        %634 = vmatprep.mubr.bf16.mxu0 0
        %635 = vmatmul.mubr.bf16.gmra.mrb[0].mxu0 %v339
        %v636 = vpop.f32.mrb[0].mxu0
        %v637 = vadd.f32 %v504, %v636
        %v638 = vpop.f32.mrb[0].mxu0
        %v639 = vadd.f32 %v506, %v638
        %v640 = vpop.f32.mrb[0].mxu0
        %v641 = vadd.f32 %v508, %v640
        %v642 = vpop.f32.mrb[0].mxu0
        %v643 = vadd.f32 %v510, %v642
        %644 = vdwg.mxu0
        %v645 = vld [vmem:[#allocation2 + $0x2] sm:$0xff]
        %v646 = vld [vmem:[#allocation2 + $0xa] sm:$0xff]
        %v647 = vld [vmem:[#allocation2 + $0x1a] sm:$0xff]
        %v648 = vld [vmem:[#allocation2 + $0x22] sm:$0xff]
        %v649 = vpack.c.bf16 %v646, %v645
        %v650 = vpack.c.bf16 %v648, %v647
        %s651 = scalar_lea.vmem [#allocation7], 256
        %v652 = vld [vmem:[%s651] sm:$0xff]
        %v653 = vld [vmem:[%s651 + $0x8] sm:$0xff]
        %v654 = vld [vmem:[%s651 + $0x10] sm:$0xff]
        %v655 = vld [vmem:[%s651 + $0x18] sm:$0xff]
        %v656 = vld [vmem:[%s651 + $0x20] sm:$0xff]
        %v657 = vld [vmem:[%s651 + $0x28] sm:$0xff]
        %v658 = vld [vmem:[%s651 + $0x30] sm:$0xff]
        %v659 = vld [vmem:[%s651 + $0x38] sm:$0xff]
        %v660 = vld [vmem:[%s651 + $0x40] sm:$0xff]
        %v661 = vld [vmem:[%s651 + $0x48] sm:$0xff]
        %v662 = vld [vmem:[%s651 + $0x50] sm:$0xff]
        %v663 = vld [vmem:[%s651 + $0x58] sm:$0xff]
        %v664 = vld [vmem:[%s651 + $0x60] sm:$0xff]
        %v665 = vld [vmem:[%s651 + $0x68] sm:$0xff]
        %v666 = vld [vmem:[%s651 + $0x70] sm:$0xff]
        %v667 = vld [vmem:[%s651 + $0x78] sm:$0xff]
        %v684 = vunpack.c.l.b16 %v652
        %v685 = vunpack.c.h.b16 %v652
        %v686 = vunpack.c.l.b16 %v653
        %v687 = vunpack.c.h.b16 %v653
        %v688 = vunpack.c.l.b16 %v654
        %v689 = vunpack.c.h.b16 %v654
        %v690 = vunpack.c.l.b16 %v655
        %v691 = vunpack.c.h.b16 %v655
        %v692 = vunpack.c.l.b16 %v656
        %v693 = vunpack.c.h.b16 %v656
        %v694 = vunpack.c.l.b16 %v657
        %v695 = vunpack.c.h.b16 %v657
        %v696 = vunpack.c.l.b16 %v658
        %v697 = vunpack.c.h.b16 %v658
        %v698 = vunpack.c.l.b16 %v659
        %v699 = vunpack.c.h.b16 %v659
        %v700 = vunpack.c.l.b16 %v660
        %v701 = vunpack.c.h.b16 %v660
        %v702 = vunpack.c.l.b16 %v661
        %v703 = vunpack.c.h.b16 %v661
        %v704 = vunpack.c.l.b16 %v662
        %v705 = vunpack.c.h.b16 %v662
        %v706 = vunpack.c.l.b16 %v663
        %v707 = vunpack.c.h.b16 %v663
        %v708 = vunpack.c.l.b16 %v664
        %v709 = vunpack.c.h.b16 %v664
        %v710 = vunpack.c.l.b16 %v665
        %v711 = vunpack.c.h.b16 %v665
        %v712 = vunpack.c.l.b16 %v666
        %v713 = vunpack.c.h.b16 %v666
        %v714 = vunpack.c.l.b16 %v667
        %v715 = vunpack.c.h.b16 %v667
        %v716 = vpack.c.b16 %v686, %v684
        %v717 = vpack.c.b16 %v687, %v685
        %v718 = vpack.c.b16 %v690, %v688
        %v719 = vpack.c.b16 %v691, %v689
        %v720 = vpack.c.b16 %v694, %v692
        %v721 = vpack.c.b16 %v695, %v693
        %v722 = vpack.c.b16 %v698, %v696
        %v723 = vpack.c.b16 %v699, %v697
        %v724 = vpack.c.b16 %v702, %v700
        %v725 = vpack.c.b16 %v703, %v701
        %v726 = vpack.c.b16 %v706, %v704
        %v727 = vpack.c.b16 %v707, %v705
        %v728 = vpack.c.b16 %v710, %v708
        %v729 = vpack.c.b16 %v711, %v709
        %v730 = vpack.c.b16 %v714, %v712
        %v731 = vpack.c.b16 %v715, %v713
        %748 = vmatprep.subr.bf16.mxu0 %v717
        %749 = vmatpush1.bf16.msra.mxu0 %v716
        %750 = vmatprep.subr.bf16.mxu0 %v719
        %751 = vmatpush1.bf16.msra.mxu0 %v718
        %752 = vmatprep.subr.bf16.mxu0 %v721
        %753 = vmatpush1.bf16.msra.mxu0 %v720
        %754 = vmatprep.subr.bf16.mxu0 %v723
        %755 = vmatpush1.bf16.msra.mxu0 %v722
        %756 = vmatprep.subr.bf16.mxu0 %v725
        %757 = vmatpush1.bf16.msra.mxu0 %v724
        %758 = vmatprep.subr.bf16.mxu0 %v727
        %759 = vmatpush1.bf16.msra.mxu0 %v726
        %760 = vmatprep.subr.bf16.mxu0 %v729
        %761 = vmatpush1.bf16.msra.mxu0 %v728
        %762 = vmatprep.subr.bf16.mxu0 %v731
        %763 = vmatpush1.bf16.msra.mxu0 %v730
        %764 = vmatprep.subr.bf16.mxu0 0
        %765 = vmatpush1.bf16.msra.mxu0 0
        %766 = vmatprep.subr.bf16.mxu0 0
        %767 = vmatpush1.bf16.msra.mxu0 0
        %768 = vmatprep.subr.bf16.mxu0 0
        %769 = vmatpush1.bf16.msra.mxu0 0
        %770 = vmatprep.subr.bf16.mxu0 0
        %771 = vmatpush1.bf16.msra.mxu0 0
        %772 = vmatprep.subr.bf16.mxu0 0
        %773 = vmatpush1.bf16.msra.mxu0 0
        %774 = vmatprep.subr.bf16.mxu0 0
        %775 = vmatpush1.bf16.msra.mxu0 0
        %776 = vmatprep.subr.bf16.mxu0 0
        %777 = vmatpush1.bf16.msra.mxu0 0
        %778 = vmatprep.subr.bf16.mxu0 0
        %779 = vmatpush1.bf16.msra.mxu0 0
        %780 = vmatprep.mubr.bf16.mxu0 0
        %781 = vmatmul.mubr.bf16.gmra.mrb[0].mxu0 %v649
        %v782 = vpop.f32.mrb[0].mxu0
        %v783 = vadd.f32 0.0, %v782
        %v784 = vpop.f32.mrb[0].mxu0
        %v785 = vadd.f32 0.0, %v784
        %v786 = vpop.f32.mrb[0].mxu0
        %v787 = vadd.f32 0.0, %v786
        %v788 = vpop.f32.mrb[0].mxu0
        %v789 = vadd.f32 0.0, %v788
        %790 = vmatprep.mubr.bf16.mxu0 0
        %791 = vmatmul.mubr.bf16.gmra.mrb[0].mxu0 %v650
        %v792 = vpop.f32.mrb[0].mxu0
        %v793 = vadd.f32 0.0, %v792
        %v794 = vpop.f32.mrb[0].mxu0
        %v795 = vadd.f32 0.0, %v794
        %v796 = vpop.f32.mrb[0].mxu0
        %v797 = vadd.f32 0.0, %v796
        %v798 = vpop.f32.mrb[0].mxu0
        %v799 = vadd.f32 0.0, %v798
        %800 = vdwg.mxu0
        %v801 = vadd.f32 %v627, %v783
        %v802 = vadd.f32 %v629, %v785
        %v803 = vadd.f32 %v631, %v787
        %v804 = vadd.f32 %v633, %v789
        %v805 = vadd.f32 %v637, %v793
        %v806 = vadd.f32 %v639, %v795
        %v807 = vadd.f32 %v641, %v797
        %v808 = vadd.f32 %v643, %v799
        %v809 = vld [vmem:[%s2] sm:$0x3]
        %v811 = vlaneseq
        %v812 = vshrl.u32 %v811, 7
        %v813 = vsub.s32 0, %v812
        %v814 = vrot.slane %v809, %v813
        %v815 = vlaneseq
        %v816 = vshrl.u32 %v815, 7
        %v817 = vsub.s32 1, %v816
        %v818 = vrot.slane %v809, %v817
        %v821 = vadd.f32 %v801, %v814
        %v822 = vadd.f32 %v802, %v818
        %v823 = vadd.f32 %v803, %v814
        %v824 = vadd.f32 %v804, %v818
        %v825 = vadd.f32 %v805, %v814
        %v826 = vadd.f32 %v806, %v818
        %v827 = vadd.f32 %v807, %v814
        %v828 = vadd.f32 %v808, %v818
        %v829 = vlaneseq
        %vm830 = vcmp.ge.s32.totalorder %v829, 0
        %vm831 = vcmp.lt.s32.totalorder %v829, 256
        %vm832 = vmand %vm830, %vm831
        %833 = vst.msk [vmem:[#allocation3] ss:$8 sm:$0x3] %vm832, 0.0
        %834 = vst.msk [vmem:[#allocation3] ss:$8 sm:$0x0] %vm832, 0.0
        %s835 = scalar_lea.vmem [#allocation3], 48
        %836 = vst.msk [vmem:[%s835] ss:$8 sm:$0x3] %vm832, 0.0
        %837 = vst.msk [vmem:[%s835] ss:$8 sm:$0x0] %vm832, 0.0
        %s838 = scalar_lea.vmem [#allocation3], 33
        %839 = vst.msk [vmem:[%s838] ss:$8 sm:$0x3] %vm832, 0.0
        %840 = vst.msk [vmem:[%s838] ss:$8 sm:$0x0] %vm832, 0.0
        %s841 = scalar_lea.vmem [#allocation3], 81
        %842 = vst.msk [vmem:[%s841] ss:$8 sm:$0x3] %vm832, 0.0
        %843 = vst.msk [vmem:[%s841] ss:$8 sm:$0x0] %vm832, 0.0
        %v844 = vmax.f32 %v821, 0.0
        %v845 = vmax.f32 %v822, 0.0
        %v846 = vmax.f32 %v823, 0.0
        %v847 = vmax.f32 %v824, 0.0
        %v848 = vmax.f32 %v825, 0.0
        %v849 = vmax.f32 %v826, 0.0
        %v850 = vmax.f32 %v827, 0.0
        %v851 = vmax.f32 %v828, 0.0
        %vm860 = vcmask 1040384
        %v861 = vrot.slane %v844, 7
        %v862 = vrot.slane %v845, 7
        %v863 = vrot.slane %v846, 7
        %v864 = vsel %vm860, %v861, %v863
        %v865 = vrot.slane %v847, 7
        %v866 = vsel %vm860, %v862, %v865
        %v867 = vrot.slane %v848, 7
        %v868 = vrot.slane %v849, 7
        %v869 = vrot.slane %v850, 7
        %v870 = vsel %vm860, %v867, %v869
        %v871 = vrot.slane %v851, 7
        %v872 = vsel %vm860, %v868, %v871
        %885 = vst [vmem:[#allocation3] sm:$0xfe] %v861
        %886 = vst [vmem:[#allocation3 + $0x8] sm:$0xfe] %v862
        %887 = vst [vmem:[#allocation3 + $0x10] sm:$0xff] %v864
        %888 = vst [vmem:[#allocation3 + $0x18] sm:$0xff] %v866
        %889 = vst [vmem:[#allocation3 + $0x20] sm:$0x1] %v863
        %890 = vst [vmem:[#allocation3 + $0x28] sm:$0x1] %v865
        %891 = vst [vmem:[#allocation3 + $0x30] sm:$0xfe] %v867
        %892 = vst [vmem:[#allocation3 + $0x38] sm:$0xfe] %v868
        %893 = vst [vmem:[#allocation3 + $0x40] sm:$0xff] %v870
        %894 = vst [vmem:[#allocation3 + $0x48] sm:$0xff] %v872
        %895 = vst [vmem:[#allocation3 + $0x50] sm:$0x1] %v869
        %896 = vst [vmem:[#allocation3 + $0x58] sm:$0x1] %v871
        %v897 = vld [vmem:[#allocation3] sm:$0xff]
        %v898 = vld [vmem:[#allocation3 + $0x8] sm:$0xff]
        %v899 = vld [vmem:[#allocation3 + $0x10] sm:$0xff]
        %v900 = vld [vmem:[#allocation3 + $0x18] sm:$0xff]
        %v901 = vld [vmem:[#allocation3 + $0x30] sm:$0xff]
        %v902 = vld [vmem:[#allocation3 + $0x38] sm:$0xff]
        %v903 = vld [vmem:[#allocation3 + $0x40] sm:$0xff]
        %v904 = vld [vmem:[#allocation3 + $0x48] sm:$0xff]
        %v905 = vpack.c.bf16 %v899, %v897
        %v906 = vpack.c.bf16 %v900, %v898
        %v907 = vpack.c.bf16 %v903, %v901
        %v908 = vpack.c.bf16 %v904, %v902
        %v909 = vld [vmem:[#allocation9] sm:$0xf]
        %v910 = vld [vmem:[#allocation9 + $0x4] sm:$0xf]
        %v911 = vld [vmem:[#allocation9 + $0x8] sm:$0xf]
        %v912 = vld [vmem:[#allocation9 + $0xc] sm:$0xf]
        %v913 = vld [vmem:[#allocation9 + $0x10] sm:$0xf]
        %v914 = vld [vmem:[#allocation9 + $0x14] sm:$0xf]
        %v915 = vld [vmem:[#allocation9 + $0x18] sm:$0xf]
        %v916 = vld [vmem:[#allocation9 + $0x1c] sm:$0xf]
        %v917 = vld [vmem:[#allocation9 + $0x20] sm:$0xf]
        %v918 = vld [vmem:[#allocation9 + $0x24] sm:$0xf]
        %v919 = vld [vmem:[#allocation9 + $0x28] sm:$0xf]
        %v920 = vld [vmem:[#allocation9 + $0x2c] sm:$0xf]
        %v921 = vld [vmem:[#allocation9 + $0x30] sm:$0xf]
        %v922 = vld [vmem:[#allocation9 + $0x34] sm:$0xf]
        %v923 = vld [vmem:[#allocation9 + $0x38] sm:$0xf]
        %v924 = vld [vmem:[#allocation9 + $0x3c] sm:$0xf]
        %v925 = vld [vmem:[#allocation9 + $0x40] sm:$0xf]
        %v926 = vld [vmem:[#allocation9 + $0x44] sm:$0xf]
        %v927 = vld [vmem:[#allocation9 + $0x48] sm:$0xf]
        %v928 = vld [vmem:[#allocation9 + $0x4c] sm:$0xf]
        %v929 = vld [vmem:[#allocation9 + $0x50] sm:$0xf]
        %v930 = vld [vmem:[#allocation9 + $0x54] sm:$0xf]
        %v931 = vld [vmem:[#allocation9 + $0x58] sm:$0xf]
        %v932 = vld [vmem:[#allocation9 + $0x5c] sm:$0xf]
        %v933 = vld [vmem:[#allocation9 + $0x60] sm:$0xf]
        %v934 = vld [vmem:[#allocation9 + $0x64] sm:$0xf]
        %v935 = vld [vmem:[#allocation9 + $0x68] sm:$0xf]
        %v936 = vld [vmem:[#allocation9 + $0x6c] sm:$0xf]
        %v937 = vld [vmem:[#allocation9 + $0x70] sm:$0xf]
        %v938 = vld [vmem:[#allocation9 + $0x74] sm:$0xf]
        %v939 = vld [vmem:[#allocation9 + $0x78] sm:$0xf]
        %v940 = vld [vmem:[#allocation9 + $0x7c] sm:$0xf]
        %v941 = vld [vmem:[#allocation3] sm:$0xfe]
        %v942 = vld [vmem:[#allocation3 + $0x8] sm:$0xfe]
        %v943 = vld [vmem:[#allocation3 + $0x20] sm:$0x1]
        %v944 = vld [vmem:[#allocation3 + $0x28] sm:$0x1]
        %v945 = vld [vmem:[#allocation3 + $0x30] sm:$0xfe]
        %v946 = vld [vmem:[#allocation3 + $0x38] sm:$0xfe]
        %v947 = vld [vmem:[#allocation3 + $0x50] sm:$0x1]
        %v948 = vld [vmem:[#allocation3 + $0x58] sm:$0x1]
        %vm961 = vcmask 1046528
        %v962 = vrot.slane %v941, 1
        %v963 = vrot.slane %v899, 1
        %v964 = vsel %vm961, %v962, %v963
        %v965 = vrot.slane %v942, 1
        %v966 = vrot.slane %v900, 1
        %v967 = vsel %vm961, %v965, %v966
        %v968 = vrot.slane %v943, 1
        %v969 = vsel %vm961, %v963, %v968
        %v970 = vrot.slane %v944, 1
        %v971 = vsel %vm961, %v966, %v970
        %v972 = vrot.slane %v945, 1
        %v973 = vrot.slane %v903, 1
        %v974 = vsel %vm961, %v972, %v973
        %v975 = vrot.slane %v946, 1
        %v976 = vrot.slane %v904, 1
        %v977 = vsel %vm961, %v975, %v976
        %v978 = vrot.slane %v947, 1
        %v979 = vsel %vm961, %v973, %v978
        %v980 = vrot.slane %v948, 1
        %v981 = vsel %vm961, %v976, %v980
        %v990 = vpack.c.bf16 %v969, %v964
        %v991 = vpack.c.bf16 %v971, %v967
        %v992 = vpack.c.bf16 %v979, %v974
        %v993 = vpack.c.bf16 %v981, %v977
        %s994 = scalar_lea.vmem [#allocation9], 128
        %v995 = vld [vmem:[%s994] sm:$0xf]
        %v996 = vld [vmem:[%s994 + $0x4] sm:$0xf]
        %v997 = vld [vmem:[%s994 + $0x8] sm:$0xf]
        %v998 = vld [vmem:[%s994 + $0xc] sm:$0xf]
        %v999 = vld [vmem:[%s994 + $0x10] sm:$0xf]
        %v1000 = vld [vmem:[%s994 + $0x14] sm:$0xf]
        %v1001 = vld [vmem:[%s994 + $0x18] sm:$0xf]
        %v1002 = vld [vmem:[%s994 + $0x1c] sm:$0xf]
        %v1003 = vld [vmem:[%s994 + $0x20] sm:$0xf]
        %v1004 = vld [vmem:[%s994 + $0x24] sm:$0xf]
        %v1005 = vld [vmem:[%s994 + $0x28] sm:$0xf]
        %v1006 = vld [vmem:[%s994 + $0x2c] sm:$0xf]
        %v1007 = vld [vmem:[%s994 + $0x30] sm:$0xf]
        %v1008 = vld [vmem:[%s994 + $0x34] sm:$0xf]
        %v1009 = vld [vmem:[%s994 + $0x38] sm:$0xf]
        %v1010 = vld [vmem:[%s994 + $0x3c] sm:$0xf]
        %v1011 = vld [vmem:[%s994 + $0x40] sm:$0xf]
        %v1012 = vld [vmem:[%s994 + $0x44] sm:$0xf]
        %v1013 = vld [vmem:[%s994 + $0x48] sm:$0xf]
        %v1014 = vld [vmem:[%s994 + $0x4c] sm:$0xf]
        %v1015 = vld [vmem:[%s994 + $0x50] sm:$0xf]
        %v1016 = vld [vmem:[%s994 + $0x54] sm:$0xf]
        %v1017 = vld [vmem:[%s994 + $0x58] sm:$0xf]
        %v1018 = vld [vmem:[%s994 + $0x5c] sm:$0xf]
        %v1019 = vld [vmem:[%s994 + $0x60] sm:$0xf]
        %v1020 = vld [vmem:[%s994 + $0x64] sm:$0xf]
        %v1021 = vld [vmem:[%s994 + $0x68] sm:$0xf]
        %v1022 = vld [vmem:[%s994 + $0x6c] sm:$0xf]
        %v1023 = vld [vmem:[%s994 + $0x70] sm:$0xf]
        %v1024 = vld [vmem:[%s994 + $0x74] sm:$0xf]
        %v1025 = vld [vmem:[%s994 + $0x78] sm:$0xf]
        %v1026 = vld [vmem:[%s994 + $0x7c] sm:$0xf]
        %v1059 = vunpack.c.l.b16 %v995
        %v1060 = vunpack.c.l.b16 %v996
        %v1061 = vunpack.c.l.b16 %v997
        %v1062 = vunpack.c.l.b16 %v998
        %v1063 = vunpack.c.l.b16 %v999
        %v1064 = vunpack.c.l.b16 %v1000
        %v1065 = vunpack.c.l.b16 %v1001
        %v1066 = vunpack.c.l.b16 %v1002
        %v1067 = vunpack.c.l.b16 %v1003
        %v1068 = vunpack.c.l.b16 %v1004
        %v1069 = vunpack.c.l.b16 %v1005
        %v1070 = vunpack.c.l.b16 %v1006
        %v1071 = vunpack.c.l.b16 %v1007
        %v1072 = vunpack.c.l.b16 %v1008
        %v1073 = vunpack.c.l.b16 %v1009
        %v1074 = vunpack.c.l.b16 %v1010
        %v1075 = vunpack.c.l.b16 %v1011
        %v1076 = vunpack.c.l.b16 %v1012
        %v1077 = vunpack.c.l.b16 %v1013
        %v1078 = vunpack.c.l.b16 %v1014
        %v1079 = vunpack.c.l.b16 %v1015
        %v1080 = vunpack.c.l.b16 %v1016
        %v1081 = vunpack.c.l.b16 %v1017
        %v1082 = vunpack.c.l.b16 %v1018
        %v1083 = vunpack.c.l.b16 %v1019
        %v1084 = vunpack.c.l.b16 %v1020
        %v1085 = vunpack.c.l.b16 %v1021
        %v1086 = vunpack.c.l.b16 %v1022
        %v1087 = vunpack.c.l.b16 %v1023
        %v1088 = vunpack.c.l.b16 %v1024
        %v1089 = vunpack.c.l.b16 %v1025
        %v1090 = vunpack.c.l.b16 %v1026
        %v1091 = vpack.c.b16 %v1060, %v1059
        %v1092 = vpack.c.b16 %v1062, %v1061
        %v1093 = vpack.c.b16 %v1064, %v1063
        %v1094 = vpack.c.b16 %v1066, %v1065
        %v1095 = vpack.c.b16 %v1068, %v1067
        %v1096 = vpack.c.b16 %v1070, %v1069
        %v1097 = vpack.c.b16 %v1072, %v1071
        %v1098 = vpack.c.b16 %v1074, %v1073
        %v1099 = vpack.c.b16 %v1076, %v1075
        %v1100 = vpack.c.b16 %v1078, %v1077
        %v1101 = vpack.c.b16 %v1080, %v1079
        %v1102 = vpack.c.b16 %v1082, %v1081
        %v1103 = vpack.c.b16 %v1084, %v1083
        %v1104 = vpack.c.b16 %v1086, %v1085
        %v1105 = vpack.c.b16 %v1088, %v1087
        %v1106 = vpack.c.b16 %v1090, %v1089
        %1123 = vmatprep.subr.bf16.mxu0 0
        %1124 = vmatpush1.bf16.msra.mxu0 %v1091
        %1125 = vmatprep.subr.bf16.mxu0 0
        %1126 = vmatpush1.bf16.msra.mxu0 %v1092
        %1127 = vmatprep.subr.bf16.mxu0 0
        %1128 = vmatpush1.bf16.msra.mxu0 %v1093
        %1129 = vmatprep.subr.bf16.mxu0 0
        %1130 = vmatpush1.bf16.msra.mxu0 %v1094
        %1131 = vmatprep.subr.bf16.mxu0 0
        %1132 = vmatpush1.bf16.msra.mxu0 %v1095
        %1133 = vmatprep.subr.bf16.mxu0 0
        %1134 = vmatpush1.bf16.msra.mxu0 %v1096
        %1135 = vmatprep.subr.bf16.mxu0 0
        %1136 = vmatpush1.bf16.msra.mxu0 %v1097
        %1137 = vmatprep.subr.bf16.mxu0 0
        %1138 = vmatpush1.bf16.msra.mxu0 %v1098
        %1139 = vmatprep.subr.bf16.mxu0 0
        %1140 = vmatpush1.bf16.msra.mxu0 %v1099
        %1141 = vmatprep.subr.bf16.mxu0 0
        %1142 = vmatpush1.bf16.msra.mxu0 %v1100
        %1143 = vmatprep.subr.bf16.mxu0 0
        %1144 = vmatpush1.bf16.msra.mxu0 %v1101
        %1145 = vmatprep.subr.bf16.mxu0 0
        %1146 = vmatpush1.bf16.msra.mxu0 %v1102
        %1147 = vmatprep.subr.bf16.mxu0 0
        %1148 = vmatpush1.bf16.msra.mxu0 %v1103
        %1149 = vmatprep.subr.bf16.mxu0 0
        %1150 = vmatpush1.bf16.msra.mxu0 %v1104
        %1151 = vmatprep.subr.bf16.mxu0 0
        %1152 = vmatpush1.bf16.msra.mxu0 %v1105
        %1153 = vmatprep.subr.bf16.mxu0 0
        %1154 = vmatpush1.bf16.msra.mxu0 %v1106
        %1155 = vmatprep.mubr.bf16.mxu0 %v991
        %1156 = vmatmul.mubr.bf16.gmra.mrb[0].mxu0 %v990
        %v1157 = vpop.f32.mrb[0].mxu0
        %v1158 = vadd.f32 0.0, %v1157
        %v1159 = vpop.f32.mrb[0].mxu0
        %v1160 = vpop.f32.mrb[0].mxu0
        %v1161 = vadd.f32 0.0, %v1160
        %v1162 = vpop.f32.mrb[0].mxu0
        %1163 = vmatprep.mubr.bf16.mxu0 %v993
        %1164 = vmatmul.mubr.bf16.gmra.mrb[0].mxu0 %v992
        %v1165 = vpop.f32.mrb[0].mxu0
        %v1166 = vadd.f32 0.0, %v1165
        %v1167 = vpop.f32.mrb[0].mxu0
        %v1168 = vpop.f32.mrb[0].mxu0
        %v1169 = vadd.f32 0.0, %v1168
        %v1170 = vpop.f32.mrb[0].mxu0
        %1171 = vdwg.mxu0
        %v1204 = vunpack.c.l.b16 %v909
        %v1205 = vunpack.c.l.b16 %v910
        %v1206 = vunpack.c.l.b16 %v911
        %v1207 = vunpack.c.l.b16 %v912
        %v1208 = vunpack.c.l.b16 %v913
        %v1209 = vunpack.c.l.b16 %v914
        %v1210 = vunpack.c.l.b16 %v915
        %v1211 = vunpack.c.l.b16 %v916
        %v1212 = vunpack.c.l.b16 %v917
        %v1213 = vunpack.c.l.b16 %v918
        %v1214 = vunpack.c.l.b16 %v919
        %v1215 = vunpack.c.l.b16 %v920
        %v1216 = vunpack.c.l.b16 %v921
        %v1217 = vunpack.c.l.b16 %v922
        %v1218 = vunpack.c.l.b16 %v923
        %v1219 = vunpack.c.l.b16 %v924
        %v1220 = vunpack.c.l.b16 %v925
        %v1221 = vunpack.c.l.b16 %v926
        %v1222 = vunpack.c.l.b16 %v927
        %v1223 = vunpack.c.l.b16 %v928
        %v1224 = vunpack.c.l.b16 %v929
        %v1225 = vunpack.c.l.b16 %v930
        %v1226 = vunpack.c.l.b16 %v931
        %v1227 = vunpack.c.l.b16 %v932
        %v1228 = vunpack.c.l.b16 %v933
        %v1229 = vunpack.c.l.b16 %v934
        %v1230 = vunpack.c.l.b16 %v935
        %v1231 = vunpack.c.l.b16 %v936
        %v1232 = vunpack.c.l.b16 %v937
        %v1233 = vunpack.c.l.b16 %v938
        %v1234 = vunpack.c.l.b16 %v939
        %v1235 = vunpack.c.l.b16 %v940
        %v1236 = vpack.c.b16 %v1205, %v1204
        %v1237 = vpack.c.b16 %v1207, %v1206
        %v1238 = vpack.c.b16 %v1209, %v1208
        %v1239 = vpack.c.b16 %v1211, %v1210
        %v1240 = vpack.c.b16 %v1213, %v1212
        %v1241 = vpack.c.b16 %v1215, %v1214
        %v1242 = vpack.c.b16 %v1217, %v1216
        %v1243 = vpack.c.b16 %v1219, %v1218
        %v1244 = vpack.c.b16 %v1221, %v1220
        %v1245 = vpack.c.b16 %v1223, %v1222
        %v1246 = vpack.c.b16 %v1225, %v1224
        %v1247 = vpack.c.b16 %v1227, %v1226
        %v1248 = vpack.c.b16 %v1229, %v1228
        %v1249 = vpack.c.b16 %v1231, %v1230
        %v1250 = vpack.c.b16 %v1233, %v1232
        %v1251 = vpack.c.b16 %v1235, %v1234
        %1268 = vmatprep.subr.bf16.mxu0 0
        %1269 = vmatpush1.bf16.msra.mxu0 %v1236
        %1270 = vmatprep.subr.bf16.mxu0 0
        %1271 = vmatpush1.bf16.msra.mxu0 %v1237
        %1272 = vmatprep.subr.bf16.mxu0 0
        %1273 = vmatpush1.bf16.msra.mxu0 %v1238
        %1274 = vmatprep.subr.bf16.mxu0 0
        %1275 = vmatpush1.bf16.msra.mxu0 %v1239
        %1276 = vmatprep.subr.bf16.mxu0 0
        %1277 = vmatpush1.bf16.msra.mxu0 %v1240
        %1278 = vmatprep.subr.bf16.mxu0 0
        %1279 = vmatpush1.bf16.msra.mxu0 %v1241
        %1280 = vmatprep.subr.bf16.mxu0 0
        %1281 = vmatpush1.bf16.msra.mxu0 %v1242
        %1282 = vmatprep.subr.bf16.mxu0 0
        %1283 = vmatpush1.bf16.msra.mxu0 %v1243
        %1284 = vmatprep.subr.bf16.mxu0 0
        %1285 = vmatpush1.bf16.msra.mxu0 %v1244
        %1286 = vmatprep.subr.bf16.mxu0 0
        %1287 = vmatpush1.bf16.msra.mxu0 %v1245
        %1288 = vmatprep.subr.bf16.mxu0 0
        %1289 = vmatpush1.bf16.msra.mxu0 %v1246
        %1290 = vmatprep.subr.bf16.mxu0 0
        %1291 = vmatpush1.bf16.msra.mxu0 %v1247
        %1292 = vmatprep.subr.bf16.mxu0 0
        %1293 = vmatpush1.bf16.msra.mxu0 %v1248
        %1294 = vmatprep.subr.bf16.mxu0 0
        %1295 = vmatpush1.bf16.msra.mxu0 %v1249
        %1296 = vmatprep.subr.bf16.mxu0 0
        %1297 = vmatpush1.bf16.msra.mxu0 %v1250
        %1298 = vmatprep.subr.bf16.mxu0 0
        %1299 = vmatpush1.bf16.msra.mxu0 %v1251
        %1300 = vmatprep.mubr.bf16.mxu0 %v906
        %1301 = vmatmul.mubr.bf16.gmra.mrb[0].mxu0 %v905
        %v1302 = vpop.f32.mrb[0].mxu0
        %v1303 = vadd.f32 %v1158, %v1302
        %v1304 = vpop.f32.mrb[0].mxu0
        %v1305 = vpop.f32.mrb[0].mxu0
        %v1306 = vadd.f32 %v1161, %v1305
        %v1307 = vpop.f32.mrb[0].mxu0
        %1308 = vmatprep.mubr.bf16.mxu0 %v908
        %1309 = vmatmul.mubr.bf16.gmra.mrb[0].mxu0 %v907
        %v1310 = vpop.f32.mrb[0].mxu0
        %v1311 = vadd.f32 %v1166, %v1310
        %v1312 = vpop.f32.mrb[0].mxu0
        %v1313 = vpop.f32.mrb[0].mxu0
        %v1314 = vadd.f32 %v1169, %v1313
        %v1315 = vpop.f32.mrb[0].mxu0
        %1316 = vdwg.mxu0
        %v1317 = vld [vmem:[#allocation3] sm:$0xfc]
        %v1318 = vld [vmem:[#allocation3 + $0x8] sm:$0xfc]
        %v1319 = vld [vmem:[#allocation3 + $0x20] sm:$0x3]
        %v1320 = vld [vmem:[#allocation3 + $0x28] sm:$0x3]
        %v1321 = vld [vmem:[#allocation3 + $0x30] sm:$0xfc]
        %v1322 = vld [vmem:[#allocation3 + $0x38] sm:$0xfc]
        %v1323 = vld [vmem:[#allocation3 + $0x50] sm:$0x3]
        %v1324 = vld [vmem:[#allocation3 + $0x58] sm:$0x3]
        %vm1333 = vcmask 1045504
        %v1334 = vrot.slane %v1317, 2
        %v1335 = vrot.slane %v899, 2
        %v1336 = vsel %vm1333, %v1334, %v1335
        %v1337 = vrot.slane %v1318, 2
        %v1338 = vrot.slane %v900, 2
        %v1339 = vsel %vm1333, %v1337, %v1338
        %v1340 = vrot.slane %v1319, 2
        %v1341 = vsel %vm1333, %v1335, %v1340
        %v1342 = vrot.slane %v1320, 2
        %v1343 = vsel %vm1333, %v1338, %v1342
        %v1344 = vrot.slane %v1321, 2
        %v1345 = vrot.slane %v903, 2
        %v1346 = vsel %vm1333, %v1344, %v1345
        %v1347 = vrot.slane %v1322, 2
        %v1348 = vrot.slane %v904, 2
        %v1349 = vsel %vm1333, %v1347, %v1348
        %v1350 = vrot.slane %v1323, 2
        %v1351 = vsel %vm1333, %v1345, %v1350
        %v1352 = vrot.slane %v1324, 2
        %v1353 = vsel %vm1333, %v1348, %v1352
        %v1362 = vpack.c.bf16 %v1341, %v1336
        %v1363 = vpack.c.bf16 %v1343, %v1339
        %v1364 = vpack.c.bf16 %v1351, %v1346
        %v1365 = vpack.c.bf16 %v1353, %v1349
        %s1366 = scalar_lea.vmem [#allocation9], 256
        %v1367 = vld [vmem:[%s1366] sm:$0xf]
        %v1368 = vld [vmem:[%s1366 + $0x4] sm:$0xf]
        %v1369 = vld [vmem:[%s1366 + $0x8] sm:$0xf]
        %v1370 = vld [vmem:[%s1366 + $0xc] sm:$0xf]
        %v1371 = vld [vmem:[%s1366 + $0x10] sm:$0xf]
        %v1372 = vld [vmem:[%s1366 + $0x14] sm:$0xf]
        %v1373 = vld [vmem:[%s1366 + $0x18] sm:$0xf]
        %v1374 = vld [vmem:[%s1366 + $0x1c] sm:$0xf]
        %v1375 = vld [vmem:[%s1366 + $0x20] sm:$0xf]
        %v1376 = vld [vmem:[%s1366 + $0x24] sm:$0xf]
        %v1377 = vld [vmem:[%s1366 + $0x28] sm:$0xf]
        %v1378 = vld [vmem:[%s1366 + $0x2c] sm:$0xf]
        %v1379 = vld [vmem:[%s1366 + $0x30] sm:$0xf]
        %v1380 = vld [vmem:[%s1366 + $0x34] sm:$0xf]
        %v1381 = vld [vmem:[%s1366 + $0x38] sm:$0xf]
        %v1382 = vld [vmem:[%s1366 + $0x3c] sm:$0xf]
        %v1383 = vld [vmem:[%s1366 + $0x40] sm:$0xf]
        %v1384 = vld [vmem:[%s1366 + $0x44] sm:$0xf]
        %v1385 = vld [vmem:[%s1366 + $0x48] sm:$0xf]
        %v1386 = vld [vmem:[%s1366 + $0x4c] sm:$0xf]
        %v1387 = vld [vmem:[%s1366 + $0x50] sm:$0xf]
        %v1388 = vld [vmem:[%s1366 + $0x54] sm:$0xf]
        %v1389 = vld [vmem:[%s1366 + $0x58] sm:$0xf]
        %v1390 = vld [vmem:[%s1366 + $0x5c] sm:$0xf]
        %v1391 = vld [vmem:[%s1366 + $0x60] sm:$0xf]
        %v1392 = vld [vmem:[%s1366 + $0x64] sm:$0xf]
        %v1393 = vld [vmem:[%s1366 + $0x68] sm:$0xf]
        %v1394 = vld [vmem:[%s1366 + $0x6c] sm:$0xf]
        %v1395 = vld [vmem:[%s1366 + $0x70] sm:$0xf]
        %v1396 = vld [vmem:[%s1366 + $0x74] sm:$0xf]
        %v1397 = vld [vmem:[%s1366 + $0x78] sm:$0xf]
        %v1398 = vld [vmem:[%s1366 + $0x7c] sm:$0xf]
        %v1431 = vunpack.c.l.b16 %v1367
        %v1432 = vunpack.c.l.b16 %v1368
        %v1433 = vunpack.c.l.b16 %v1369
        %v1434 = vunpack.c.l.b16 %v1370
        %v1435 = vunpack.c.l.b16 %v1371
        %v1436 = vunpack.c.l.b16 %v1372
        %v1437 = vunpack.c.l.b16 %v1373
        %v1438 = vunpack.c.l.b16 %v1374
        %v1439 = vunpack.c.l.b16 %v1375
        %v1440 = vunpack.c.l.b16 %v1376
        %v1441 = vunpack.c.l.b16 %v1377
        %v1442 = vunpack.c.l.b16 %v1378
        %v1443 = vunpack.c.l.b16 %v1379
        %v1444 = vunpack.c.l.b16 %v1380
        %v1445 = vunpack.c.l.b16 %v1381
        %v1446 = vunpack.c.l.b16 %v1382
        %v1447 = vunpack.c.l.b16 %v1383
        %v1448 = vunpack.c.l.b16 %v1384
        %v1449 = vunpack.c.l.b16 %v1385
        %v1450 = vunpack.c.l.b16 %v1386
        %v1451 = vunpack.c.l.b16 %v1387
        %v1452 = vunpack.c.l.b16 %v1388
        %v1453 = vunpack.c.l.b16 %v1389
        %v1454 = vunpack.c.l.b16 %v1390
        %v1455 = vunpack.c.l.b16 %v1391
        %v1456 = vunpack.c.l.b16 %v1392
        %v1457 = vunpack.c.l.b16 %v1393
        %v1458 = vunpack.c.l.b16 %v1394
        %v1459 = vunpack.c.l.b16 %v1395
        %v1460 = vunpack.c.l.b16 %v1396
        %v1461 = vunpack.c.l.b16 %v1397
        %v1462 = vunpack.c.l.b16 %v1398
        %v1463 = vpack.c.b16 %v1432, %v1431
        %v1464 = vpack.c.b16 %v1434, %v1433
        %v1465 = vpack.c.b16 %v1436, %v1435
        %v1466 = vpack.c.b16 %v1438, %v1437
        %v1467 = vpack.c.b16 %v1440, %v1439
        %v1468 = vpack.c.b16 %v1442, %v1441
        %v1469 = vpack.c.b16 %v1444, %v1443
        %v1470 = vpack.c.b16 %v1446, %v1445
        %v1471 = vpack.c.b16 %v1448, %v1447
        %v1472 = vpack.c.b16 %v1450, %v1449
        %v1473 = vpack.c.b16 %v1452, %v1451
        %v1474 = vpack.c.b16 %v1454, %v1453
        %v1475 = vpack.c.b16 %v1456, %v1455
        %v1476 = vpack.c.b16 %v1458, %v1457
        %v1477 = vpack.c.b16 %v1460, %v1459
        %v1478 = vpack.c.b16 %v1462, %v1461
        %1495 = vmatprep.subr.bf16.mxu0 0
        %1496 = vmatpush1.bf16.msra.mxu0 %v1463
        %1497 = vmatprep.subr.bf16.mxu0 0
        %1498 = vmatpush1.bf16.msra.mxu0 %v1464
        %1499 = vmatprep.subr.bf16.mxu0 0
        %1500 = vmatpush1.bf16.msra.mxu0 %v1465
        %1501 = vmatprep.subr.bf16.mxu0 0
        %1502 = vmatpush1.bf16.msra.mxu0 %v1466
        %1503 = vmatprep.subr.bf16.mxu0 0
        %1504 = vmatpush1.bf16.msra.mxu0 %v1467
        %1505 = vmatprep.subr.bf16.mxu0 0
        %1506 = vmatpush1.bf16.msra.mxu0 %v1468
        %1507 = vmatprep.subr.bf16.mxu0 0
        %1508 = vmatpush1.bf16.msra.mxu0 %v1469
        %1509 = vmatprep.subr.bf16.mxu0 0
        %1510 = vmatpush1.bf16.msra.mxu0 %v1470
        %1511 = vmatprep.subr.bf16.mxu0 0
        %1512 = vmatpush1.bf16.msra.mxu0 %v1471
        %1513 = vmatprep.subr.bf16.mxu0 0
        %1514 = vmatpush1.bf16.msra.mxu0 %v1472
        %1515 = vmatprep.subr.bf16.mxu0 0
        %1516 = vmatpush1.bf16.msra.mxu0 %v1473
        %1517 = vmatprep.subr.bf16.mxu0 0
        %1518 = vmatpush1.bf16.msra.mxu0 %v1474
        %1519 = vmatprep.subr.bf16.mxu0 0
        %1520 = vmatpush1.bf16.msra.mxu0 %v1475
        %1521 = vmatprep.subr.bf16.mxu0 0
        %1522 = vmatpush1.bf16.msra.mxu0 %v1476
        %1523 = vmatprep.subr.bf16.mxu0 0
        %1524 = vmatpush1.bf16.msra.mxu0 %v1477
        %1525 = vmatprep.subr.bf16.mxu0 0
        %1526 = vmatpush1.bf16.msra.mxu0 %v1478
        %1527 = vmatprep.mubr.bf16.mxu0 %v1363
        %1528 = vmatmul.mubr.bf16.gmra.mrb[0].mxu0 %v1362
        %v1529 = vpop.f32.mrb[0].mxu0
        %v1530 = vadd.f32 0.0, %v1529
        %v1531 = vpop.f32.mrb[0].mxu0
        %v1532 = vpop.f32.mrb[0].mxu0
        %v1533 = vadd.f32 0.0, %v1532
        %v1534 = vpop.f32.mrb[0].mxu0
        %1535 = vmatprep.mubr.bf16.mxu0 %v1365
        %1536 = vmatmul.mubr.bf16.gmra.mrb[0].mxu0 %v1364
        %v1537 = vpop.f32.mrb[0].mxu0
        %v1538 = vadd.f32 0.0, %v1537
        %v1539 = vpop.f32.mrb[0].mxu0
        %v1540 = vpop.f32.mrb[0].mxu0
        %v1541 = vadd.f32 0.0, %v1540
        %v1542 = vpop.f32.mrb[0].mxu0
        %1543 = vdwg.mxu0
        %v1544 = vadd.f32 %v1303, %v1530
        %v1545 = vadd.f32 %v1306, %v1533
        %v1546 = vadd.f32 %v1311, %v1538
        %v1547 = vadd.f32 %v1314, %v1541
        %v1548 = vpack.c.bf16 %v319, %v318
        %v1549 = vpack.c.bf16 %v321, %v320
        %v1550 = vld [vmem:[#allocation10] sm:$0xf]
        %v1551 = vld [vmem:[#allocation10 + $0x4] sm:$0xf]
        %v1552 = vld [vmem:[#allocation10 + $0x8] sm:$0xf]
        %v1553 = vld [vmem:[#allocation10 + $0xc] sm:$0xf]
        %v1554 = vld [vmem:[#allocation10 + $0x10] sm:$0xf]
        %v1555 = vld [vmem:[#allocation10 + $0x14] sm:$0xf]
        %v1556 = vld [vmem:[#allocation10 + $0x18] sm:$0xf]
        %v1557 = vld [vmem:[#allocation10 + $0x1c] sm:$0xf]
        %v1558 = vld [vmem:[#allocation10 + $0x20] sm:$0xf]
        %v1559 = vld [vmem:[#allocation10 + $0x24] sm:$0xf]
        %v1560 = vld [vmem:[#allocation10 + $0x28] sm:$0xf]
        %v1561 = vld [vmem:[#allocation10 + $0x2c] sm:$0xf]
        %v1562 = vld [vmem:[#allocation10 + $0x30] sm:$0xf]
        %v1563 = vld [vmem:[#allocation10 + $0x34] sm:$0xf]
        %v1564 = vld [vmem:[#allocation10 + $0x38] sm:$0xf]
        %v1565 = vld [vmem:[#allocation10 + $0x3c] sm:$0xf]
        %v1582 = vunpack.c.l.b16 %v1550
        %v1583 = vunpack.c.l.b16 %v1551
        %v1584 = vunpack.c.l.b16 %v1552
        %v1585 = vunpack.c.l.b16 %v1553
        %v1586 = vunpack.c.l.b16 %v1554
        %v1587 = vunpack.c.l.b16 %v1555
        %v1588 = vunpack.c.l.b16 %v1556
        %v1589 = vunpack.c.l.b16 %v1557
        %v1590 = vunpack.c.l.b16 %v1558
        %v1591 = vunpack.c.l.b16 %v1559
        %v1592 = vunpack.c.l.b16 %v1560
        %v1593 = vunpack.c.l.b16 %v1561
        %v1594 = vunpack.c.l.b16 %v1562
        %v1595 = vunpack.c.l.b16 %v1563
        %v1596 = vunpack.c.l.b16 %v1564
        %v1597 = vunpack.c.l.b16 %v1565
        %v1598 = vpack.c.b16 %v1583, %v1582
        %v1599 = vpack.c.b16 %v1585, %v1584
        %v1600 = vpack.c.b16 %v1587, %v1586
        %v1601 = vpack.c.b16 %v1589, %v1588
        %v1602 = vpack.c.b16 %v1591, %v1590
        %v1603 = vpack.c.b16 %v1593, %v1592
        %v1604 = vpack.c.b16 %v1595, %v1594
        %v1605 = vpack.c.b16 %v1597, %v1596
        %1614 = vmatprep.subr.bf16.mxu0 0
        %1615 = vmatpush1.bf16.msra.mxu0 %v1598
        %1616 = vmatprep.subr.bf16.mxu0 0
        %1617 = vmatpush1.bf16.msra.mxu0 %v1599
        %1618 = vmatprep.subr.bf16.mxu0 0
        %1619 = vmatpush1.bf16.msra.mxu0 %v1600
        %1620 = vmatprep.subr.bf16.mxu0 0
        %1621 = vmatpush1.bf16.msra.mxu0 %v1601
        %1622 = vmatprep.subr.bf16.mxu0 0
        %1623 = vmatpush1.bf16.msra.mxu0 %v1602
        %1624 = vmatprep.subr.bf16.mxu0 0
        %1625 = vmatpush1.bf16.msra.mxu0 %v1603
        %1626 = vmatprep.subr.bf16.mxu0 0
        %1627 = vmatpush1.bf16.msra.mxu0 %v1604
        %1628 = vmatprep.subr.bf16.mxu0 0
        %1629 = vmatpush1.bf16.msra.mxu0 %v1605
        %1630 = vmatprep.subr.bf16.mxu0 0
        %1631 = vmatpush1.bf16.msra.mxu0 0
        %1632 = vmatprep.subr.bf16.mxu0 0
        %1633 = vmatpush1.bf16.msra.mxu0 0
        %1634 = vmatprep.subr.bf16.mxu0 0
        %1635 = vmatpush1.bf16.msra.mxu0 0
        %1636 = vmatprep.subr.bf16.mxu0 0
        %1637 = vmatpush1.bf16.msra.mxu0 0
        %1638 = vmatprep.subr.bf16.mxu0 0
        %1639 = vmatpush1.bf16.msra.mxu0 0
        %1640 = vmatprep.subr.bf16.mxu0 0
        %1641 = vmatpush1.bf16.msra.mxu0 0
        %1642 = vmatprep.subr.bf16.mxu0 0
        %1643 = vmatpush1.bf16.msra.mxu0 0
        %1644 = vmatprep.subr.bf16.mxu0 0
        %1645 = vmatpush1.bf16.msra.mxu0 0
        %1646 = vmatprep.mubr.bf16.mxu0 0
        %1647 = vmatmul.mubr.bf16.gmra.mrb[0].mxu0 %v1548
        %v1648 = vpop.f32.mrb[0].mxu0
        %v1649 = vadd.f32 0.0, %v1648
        %v1650 = vpop.f32.mrb[0].mxu0
        %v1651 = vpop.f32.mrb[0].mxu0
        %v1652 = vadd.f32 0.0, %v1651
        %v1653 = vpop.f32.mrb[0].mxu0
        %1654 = vmatprep.mubr.bf16.mxu0 0
        %1655 = vmatmul.mubr.bf16.gmra.mrb[0].mxu0 %v1549
        %v1656 = vpop.f32.mrb[0].mxu0
        %v1657 = vadd.f32 0.0, %v1656
        %v1658 = vpop.f32.mrb[0].mxu0
        %v1659 = vpop.f32.mrb[0].mxu0
        %v1660 = vadd.f32 0.0, %v1659
        %v1661 = vpop.f32.mrb[0].mxu0
        %1662 = vdwg.mxu0
        %v1663 = vadd.f32 %v1544, %v1649
        %v1664 = vadd.f32 %v1545, %v1652
        %v1665 = vadd.f32 %v1546, %v1657
        %v1666 = vadd.f32 %v1547, %v1660
        %v1671 = vcombine.high %v1663, %v1663
        %v1673 = vunpack.c.l.s4 1983009808
        %v1674 = vunpack.c.0.s8 %v1673
        %v1675 = vlaneseq
        %v1676 = vshrl.u32 %v1675, 7
        %v1677 = vsub.s32 %v1674, %v1676
        %v1678 = vrot.slane %v1663, %v1677
        %v1680 = vunpack.c.l.s4 1983009808
        %v1681 = vunpack.c.0.s8 %v1680
        %v1682 = vlaneseq
        %v1683 = vshrl.u32 %v1682, 7
        %v1684 = vsub.s32 %v1681, %v1683
        %v1685 = vrot.slane %v1671, %v1684
        %v1686 = vcombine.high %v1678, %v1678
        %v1687 = vcombine.high %v1685, %v1685
        %v1688 = vcombine.high %v1664, %v1664
        %v1690 = vunpack.c.l.s4 1983009808
        %v1691 = vunpack.c.0.s8 %v1690
        %v1692 = vlaneseq
        %v1693 = vshrl.u32 %v1692, 7
        %v1694 = vsub.s32 %v1691, %v1693
        %v1695 = vrot.slane %v1664, %v1694
        %v1697 = vunpack.c.l.s4 1983009808
        %v1698 = vunpack.c.0.s8 %v1697
        %v1699 = vlaneseq
        %v1700 = vshrl.u32 %v1699, 7
        %v1701 = vsub.s32 %v1698, %v1700
        %v1702 = vrot.slane %v1688, %v1701
        %v1703 = vcombine.high %v1695, %v1695
        %v1704 = vcombine.high %v1702, %v1702
        %v1705 = vcombine.high %v1665, %v1665
        %v1707 = vunpack.c.l.s4 1983009808
        %v1708 = vunpack.c.0.s8 %v1707
        %v1709 = vlaneseq
        %v1710 = vshrl.u32 %v1709, 7
        %v1711 = vsub.s32 %v1708, %v1710
        %v1712 = vrot.slane %v1665, %v1711
        %v1714 = vunpack.c.l.s4 1983009808
        %v1715 = vunpack.c.0.s8 %v1714
        %v1716 = vlaneseq
        %v1717 = vshrl.u32 %v1716, 7
        %v1718 = vsub.s32 %v1715, %v1717
        %v1719 = vrot.slane %v1705, %v1718
        %v1720 = vcombine.high %v1712, %v1712
        %v1721 = vcombine.high %v1719, %v1719
        %v1722 = vcombine.high %v1666, %v1666
        %v1724 = vunpack.c.l.s4 1983009808
        %v1725 = vunpack.c.0.s8 %v1724
        %v1726 = vlaneseq
        %v1727 = vshrl.u32 %v1726, 7
        %v1728 = vsub.s32 %v1725, %v1727
        %v1729 = vrot.slane %v1666, %v1728
        %v1731 = vunpack.c.l.s4 1983009808
        %v1732 = vunpack.c.0.s8 %v1731
        %v1733 = vlaneseq
        %v1734 = vshrl.u32 %v1733, 7
        %v1735 = vsub.s32 %v1732, %v1734
        %v1736 = vrot.slane %v1722, %v1735
        %v1737 = vcombine.high %v1729, %v1729
        %v1738 = vcombine.high %v1736, %v1736
        %v1755 = vrot.slane %v1678, 7
        %v1756 = vrot.slane %v1755, 2
        %v1757 = vrot.slane %v1686, 7
        %v1758 = vrot.slane %v1757, 2
        %v1759 = vrot.slane %v1685, 7
        %v1760 = vrot.slane %v1759, 2
        %v1761 = vrot.slane %v1687, 7
        %v1762 = vrot.slane %v1761, 2
        %v1763 = vrot.slane %v1695, 7
        %v1764 = vrot.slane %v1763, 2
        %v1765 = vrot.slane %v1703, 7
        %v1766 = vrot.slane %v1765, 2
        %v1767 = vrot.slane %v1702, 7
        %v1768 = vrot.slane %v1767, 2
        %v1769 = vrot.slane %v1704, 7
        %v1770 = vrot.slane %v1769, 2
        %v1771 = vrot.slane %v1712, 7
        %v1772 = vrot.slane %v1771, 2
        %v1773 = vrot.slane %v1720, 7
        %v1774 = vrot.slane %v1773, 2
        %v1775 = vrot.slane %v1719, 7
        %v1776 = vrot.slane %v1775, 2
        %v1777 = vrot.slane %v1721, 7
        %v1778 = vrot.slane %v1777, 2
        %v1779 = vrot.slane %v1729, 7
        %v1780 = vrot.slane %v1779, 2
        %v1781 = vrot.slane %v1737, 7
        %v1782 = vrot.slane %v1781, 2
        %v1783 = vrot.slane %v1736, 7
        %v1784 = vrot.slane %v1783, 2
        %v1785 = vrot.slane %v1738, 7
        %v1786 = vrot.slane %v1785, 2
        %v1803 = vadd.f32 %v1678, %v1756
        %v1804 = vadd.f32 %v1686, %v1758
        %v1805 = vadd.f32 %v1685, %v1760
        %v1806 = vadd.f32 %v1687, %v1762
        %v1807 = vadd.f32 %v1695, %v1764
        %v1808 = vadd.f32 %v1703, %v1766
        %v1809 = vadd.f32 %v1702, %v1768
        %v1810 = vadd.f32 %v1704, %v1770
        %v1811 = vadd.f32 %v1712, %v1772
        %v1812 = vadd.f32 %v1720, %v1774
        %v1813 = vadd.f32 %v1719, %v1776
        %v1814 = vadd.f32 %v1721, %v1778
        %v1815 = vadd.f32 %v1729, %v1780
        %v1816 = vadd.f32 %v1737, %v1782
        %v1817 = vadd.f32 %v1736, %v1784
        %v1818 = vadd.f32 %v1738, %v1786
        %v1819 = vld [vmem:[%s5] sm:$0x1]
        %v1821 = vlaneseq
        %v1822 = vshrl.u32 %v1821, 7
        %v1823 = vsub.s32 0, %v1822
        %v1824 = vrot.slane %v1819, %v1823
        %v1825 = vcombine.high %v1824, %v1824
        %v1827 = vunpack.c.l.s4 1983009808
        %v1828 = vunpack.c.0.s8 %v1827
        %v1829 = vlaneseq
        %v1830 = vshrl.u32 %v1829, 7
        %v1831 = vsub.s32 %v1828, %v1830
        %v1832 = vrot.slane %v1824, %v1831
        %v1834 = vunpack.c.l.s4 1983009808
        %v1835 = vunpack.c.0.s8 %v1834
        %v1836 = vlaneseq
        %v1837 = vshrl.u32 %v1836, 7
        %v1838 = vsub.s32 %v1835, %v1837
        %v1839 = vrot.slane %v1825, %v1838
        %v1840 = vcombine.high %v1832, %v1832
        %v1841 = vcombine.high %v1839, %v1839
        %v1842 = vrot.slane %v1832, 1
        %v1843 = vrot.slane %v1840, 1
        %v1844 = vrot.slane %v1839, 1
        %v1845 = vrot.slane %v1841, 1
        %v1854 = vadd.f32 %v1803, %v1832
        %v1855 = vadd.f32 %v1804, %v1842
        %v1856 = vadd.f32 %v1805, %v1840
        %v1857 = vadd.f32 %v1806, %v1843
        %v1858 = vadd.f32 %v1807, %v1839
        %v1859 = vadd.f32 %v1808, %v1844
        %v1860 = vadd.f32 %v1809, %v1841
        %v1861 = vadd.f32 %v1810, %v1845
        %v1862 = vadd.f32 %v1811, %v1832
        %v1863 = vadd.f32 %v1812, %v1842
        %v1864 = vadd.f32 %v1813, %v1840
        %v1865 = vadd.f32 %v1814, %v1843
        %v1866 = vadd.f32 %v1815, %v1839
        %v1867 = vadd.f32 %v1816, %v1844
        %v1868 = vadd.f32 %v1817, %v1841
        %v1869 = vadd.f32 %v1818, %v1845
        %v1886 = vlaneseq
        %v1887 = vshrl.u32 %v1886, 7
        %v1888 = vsub.s32 0, %v1887
        %v1889 = vrot.slane %v1854, %v1888
        %v1890 = vlaneseq
        %v1891 = vshrl.u32 %v1890, 7
        %v1892 = vsub.s32 0, %v1891
        %v1893 = vrot.slane %v1855, %v1892
        %v1894 = vlaneseq
        %v1895 = vshrl.u32 %v1894, 7
        %v1896 = vsub.s32 0, %v1895
        %v1897 = vrot.slane %v1856, %v1896
        %v1898 = vlaneseq
        %v1899 = vshrl.u32 %v1898, 7
        %v1900 = vsub.s32 0, %v1899
        %v1901 = vrot.slane %v1857, %v1900
        %v1902 = vlaneseq
        %v1903 = vshrl.u32 %v1902, 7
        %v1904 = vsub.s32 0, %v1903
        %v1905 = vrot.slane %v1858, %v1904
        %v1906 = vlaneseq
        %v1907 = vshrl.u32 %v1906, 7
        %v1908 = vsub.s32 0, %v1907
        %v1909 = vrot.slane %v1859, %v1908
        %v1910 = vlaneseq
        %v1911 = vshrl.u32 %v1910, 7
        %v1912 = vsub.s32 0, %v1911
        %v1913 = vrot.slane %v1860, %v1912
        %v1914 = vlaneseq
        %v1915 = vshrl.u32 %v1914, 7
        %v1916 = vsub.s32 0, %v1915
        %v1917 = vrot.slane %v1861, %v1916
        %v1918 = vlaneseq
        %v1919 = vshrl.u32 %v1918, 7
        %v1920 = vsub.s32 0, %v1919
        %v1921 = vrot.slane %v1862, %v1920
        %v1922 = vlaneseq
        %v1923 = vshrl.u32 %v1922, 7
        %v1924 = vsub.s32 0, %v1923
        %v1925 = vrot.slane %v1863, %v1924
        %v1926 = vlaneseq
        %v1927 = vshrl.u32 %v1926, 7
        %v1928 = vsub.s32 0, %v1927
        %v1929 = vrot.slane %v1864, %v1928
        %v1930 = vlaneseq
        %v1931 = vshrl.u32 %v1930, 7
        %v1932 = vsub.s32 0, %v1931
        %v1933 = vrot.slane %v1865, %v1932
        %v1934 = vlaneseq
        %v1935 = vshrl.u32 %v1934, 7
        %v1936 = vsub.s32 0, %v1935
        %v1937 = vrot.slane %v1866, %v1936
        %v1938 = vlaneseq
        %v1939 = vshrl.u32 %v1938, 7
        %v1940 = vsub.s32 0, %v1939
        %v1941 = vrot.slane %v1867, %v1940
        %v1942 = vlaneseq
        %v1943 = vshrl.u32 %v1942, 7
        %v1944 = vsub.s32 0, %v1943
        %v1945 = vrot.slane %v1868, %v1944
        %v1946 = vlaneseq
        %v1947 = vshrl.u32 %v1946, 7
        %v1948 = vsub.s32 0, %v1947
        %v1949 = vrot.slane %v1869, %v1948
        %vm1950 = vcmask 1041409
        %v1951 = vsel %vm1950, %v1893, %v1889
        %vm1952 = vcmask 1042434
        %v1953 = vsel %vm1952, %v1897, %v1951
        %vm1954 = vcmask 1043459
        %v1955 = vsel %vm1954, %v1901, %v1953
        %vm1956 = vcmask 1044484
        %v1957 = vsel %vm1956, %v1905, %v1955
        %vm1958 = vcmask 1045509
        %v1959 = vsel %vm1958, %v1909, %v1957
        %vm1960 = vcmask 1046534
        %v1961 = vsel %vm1960, %v1913, %v1959
        %vm1962 = vcmask 1047559
        %v1963 = vsel %vm1962, %v1917, %v1961
        %v1964 = vsel %vm1950, %v1925, %v1921
        %v1965 = vsel %vm1952, %v1929, %v1964
        %v1966 = vsel %vm1954, %v1933, %v1965
        %v1967 = vsel %vm1956, %v1937, %v1966
        %v1968 = vsel %vm1958, %v1941, %v1967
        %v1969 = vsel %vm1960, %v1945, %v1968
        %v1970 = vsel %vm1962, %v1949, %v1969
        %1973 = vst [vmem:[%s314] sm:$0xff] %v1963
        %1974 = vst [vmem:[%s314 + $0x8] sm:$0xff] %v1970
        %s1975 = sand.u32 %s164, 1
        %s1976 = scalar_lea.sflag [#allocation6], %s1975
        %s1977 = sand.u32 %s164, 1
        %s1978 = smul.addr %s1977, 16
        %s1979 = scalar_lea.vmem [#allocation12], %s1978
        // Predicated region
        $region61: #{tpu_custom_call.1} parent=43 // pred_check
          %p1980 = pneg %p174
        $region62: #{tpu_custom_call.1} parent=43 // pred_check_branch
          %1982 = sbr.rel (%p1980) target = $region64
        $region63: #{tpu_custom_call.1} parent=43 // pred_region
          %s1983 = smul.u32 2, %s25
          %s1985 = ssub.s32 256, 256
          %1986 = vsyncadd %s1976, %s1985
          %s1987 = smul.addr %s1983, 128
          %s1988 = scalar_lea.hbm %s6, %s1987
          %s1989 = sshll.u32 %s1979, 4
          %s1990 = int_to_ptr.vmem [resolvable:$true] %s1989
          %1995 = dma.vmem_to_hbm [thread:$0]  %s1990, 256, %s1988, %s1976, 128, 128, 8
        $region64: #{tpu_custom_call.1} parent=43 // pred_fallthru
          _
      $region44: #{tpu_custom_call.1} parent=5 // pred_fallthru
        _
      %p1996 = scmp.le.s32.totalorder 2, %s20
      // Predicated region
      $region65: #{tpu_custom_call.1} parent=5 // pred_check
        %p1997 = pneg %p1996
      $region66: #{tpu_custom_call.1} parent=5 // pred_check_branch
        %1999 = sbr.rel (%p1997) target = $region68
      $region67: #{tpu_custom_call.1} parent=5 // pred_region
        %s2000 = ssub.s32 %s20, 2
        // Predicated region
        $region69: #{tpu_custom_call.1} parent=67 // pred_check
          %p2001 = pneg %p180
        $region70: #{tpu_custom_call.1} parent=67 // pred_check_branch
          %2003 = sbr.rel (%p2001) target = $region72
        $region71: #{tpu_custom_call.1} parent=67 // pred_region
          %s2004 = sand.u32 %s165, 1
          %s2005 = scalar_lea.sflag [#allocation6], %s2004
          %s2006 = sand.u32 %s165, 1
          %s2007 = smul.addr %s2006, 16
          %s2008 = scalar_lea.vmem [#allocation12], %s2007
          %2009 = dma.done %s2005, 256
        $region72: #{tpu_custom_call.1} parent=67 // pred_fallthru
          _
      $region68: #{tpu_custom_call.1} parent=5 // pred_fallthru
        _
    $region6: #{tpu_custom_call.1} parent=1 // loop_footer
      %s24 = sadd.s32 1, %s20
    $region7: #{tpu_custom_call.1} parent=1 // loop_footer_branch
      %19 = sbr.rel target = $region3
    $region8: #{tpu_custom_call.1} parent=1 // loop_exit
      _
    %2010 = vsyncpa [#allocation5], 1
    %s2011 = scalar_lea.sflag [#allocation5], 1
    %2012 = vsyncpa %s2011, 1
    %2013 = vsyncpa [#allocation8], 1
    %2014 = vsyncpa [#allocation11], 1
    %2015 = vsyncpa [#allocation6], 1
    %s2016 = scalar_lea.sflag [#allocation6], 1
    %2017 = vsyncpa %s2016, 1

</llo_original>
